<compile_context>
chip_gen: v7x
topology: tpu7x:2x2x1
jax: 0.10.0
libtpu: 0.0.40
codegen_flags: <defaults>
</compile_context>

<pallas_src>
import functools

import jax
import jax.numpy as jnp
from jax.experimental import pallas as pl
from jax.experimental.pallas import tpu as pltpu


def _round_up(x, m):
    return ((x + m - 1) // m) * m


def _dist_pairsum_kernel(i_idx_ref, j_idx_ref, xi_ref, xjt_ref, out_ref, acc_ref):
    """One upper-triangular (row-tile, col-tile) pair of the distance sums.

    i_idx_ref/j_idx_ref : (K,) int32 SMEM — tile-pair schedule (ti <= tj)
    xi_ref  : (1, t, 8) VMEM — row tile ti, augmented coords on lanes
    xjt_ref : (1, 8, t) VMEM — col tile tj, augmented coords on sublanes, points lane-major
    out_ref : (1, n_tiles, 1, t) — per-point sum_q dist[p, q]; written on the last pair
    acc_ref : (n_tiles, 1, t) f32 scratch — one lane-major slab per tile, resident across pairs
    """
    k = pl.program_id(1)

    @pl.when(k == 0)
    def _():
        acc_ref[...] = jnp.zeros_like(acc_ref)

    ti = i_idx_ref[k]
    tj = j_idx_ref[k]

    xi = xi_ref[0]                     # (t, 8)  [-2x,-2y,-2z, 1, |x|^2, 0,0,0]
    xjt = xjt_ref[0]                   # (8, t)  [x, y, z, |x|^2, 1, 0,0,0]^T

    # Augmented K=8 matmul emits squared distances directly (padded points are
    # all-zero rows/cols -> contribute exactly 0).  HIGHEST keeps f32 accuracy.
    d2 = jnp.dot(xi, xjt, precision=jax.lax.Precision.HIGHEST,
                 preferred_element_type=jnp.float32)               # (t, t)
    dist = jnp.sqrt(jnp.maximum(d2, 0.0))                          # cancellation guard

    # Column sums -> slab tj (result is naturally lane-major).
    acc_ref[tj] += jnp.sum(dist, axis=0, keepdims=True)

    # Off-diagonal tiles also credit their row sums to slab ti (symmetry).
    @pl.when(ti != tj)
    def _():
        tile = dist.shape[0]
        acc_ref[ti] += jnp.sum(dist, axis=1).reshape(1, tile)

    @pl.when(k == pl.num_programs(1) - 1)
    def _():
        out_ref[0] = acc_ref[...]


@functools.partial(jax.jit, static_argnames=("tile",))
def local_density_prob(xyz, tile=1024):
    """xyz (B, N, 3) float -> per-point sampling probability (B, N) float32.

    Matches torch: prob = normalized exp(-mean_j ||x_i - x_j||).
    """
    B, N, _ = xyz.shape
    x = xyz.astype(jnp.float32)

    # Lane-dense tile edge (multiple of 128); back off when a large tile would
    # inflate the zero-padded O(n_pad^2) work by more than ~15%.
    t = max(128, (min(tile, _round_up(N, 128)) // 128) * 128)
    base = _round_up(N, 128)
    while t > 128 and _round_up(N, t) ** 2 > 1.15 * base * base:
        t //= 2
    n_pad = _round_up(N, t)
    n_tiles = n_pad // t

    # Augmented coordinates: lhs @ rhs^T == squared pairwise distance.
    sq = jnp.sum(x * x, axis=-1, keepdims=True)                    # (B, N, 1)
    one = jnp.ones_like(sq)
    zeros3 = jnp.zeros_like(x)
    lhs = jnp.concatenate([-2.0 * x, one, sq, zeros3], axis=-1)    # (B, N, 8)
    rhs = jnp.concatenate([x, sq, one, zeros3], axis=-1)           # (B, N, 8)
    # Zero-pad: padded points have ALL-ZERO augmented rows/cols -> they add
    # exactly zero distance against everything -> no in-kernel masking needed.
    lhs = jnp.pad(lhs, ((0, 0), (0, n_pad - N), (0, 0)))            # (B, n_pad, 8)
    rhs_t = jnp.transpose(
        jnp.pad(rhs, ((0, 0), (0, n_pad - N), (0, 0))), (0, 2, 1))  # (B, 8, n_pad)

    # Upper-triangular tile-pair schedule; tj varies fastest so the lhs (ti)
    # block index repeats across consecutive steps and its DMA is skipped.
    pairs = [(i, j) for i in range(n_tiles) for j in range(i, n_tiles)]
    n_pairs = len(pairs)
    i_idx = jnp.asarray([p[0] for p in pairs], dtype=jnp.int32)
    j_idx = jnp.asarray([p[1] for p in pairs], dtype=jnp.int32)

    cost = pl.CostEstimate(
        flops=int(B * n_pairs * (2 * 8 + 6) * t * t),
        transcendentals=int(B * n_pairs * t * t),
        bytes_accessed=int(4 * (B * n_pairs * 2 * 8 * t + B * n_pad + 2 * n_pairs)),
    )

    dist_sum = pl.pallas_call(
        _dist_pairsum_kernel,
        out_shape=jax.ShapeDtypeStruct((B, n_tiles, 1, t), jnp.float32),
        grid_spec=pltpu.PrefetchScalarGridSpec(
            num_scalar_prefetch=2,
            grid=(B, n_pairs),                              # pair (reduction) axis last
            in_specs=[
                pl.BlockSpec((1, t, 8), lambda b, k, ii, jj: (b, ii[k], 0)),
                pl.BlockSpec((1, 8, t), lambda b, k, ii, jj: (b, 0, jj[k])),
            ],
            out_specs=pl.BlockSpec((1, n_tiles, 1, t),
                                   lambda b, k, ii, jj: (b, 0, 0, 0)),
            scratch_shapes=[pltpu.VMEM((n_tiles, 1, t), jnp.float32)],
        ),
        compiler_params=pltpu.CompilerParams(
            dimension_semantics=("parallel", "arbitrary"),
            vmem_limit_bytes=48 * 1024 * 1024,   # > v5e 16 MiB scoped default, < v7x 64 MiB physical
        ),
        cost_estimate=cost,
    )(i_idx, j_idx, lhs, rhs_t)

    dist_sum = dist_sum.reshape(B, n_pad)[:, :N]                    # drop padded columns
    mean_d = dist_sum / jnp.float32(N)
    # Min-shift before exp: cancels exactly in the normalization but prevents
    # exp underflow -> 0/0 NaN probs on widely spread clouds.
    mean_d = mean_d - jnp.min(mean_d, axis=-1, keepdims=True)
    density = jnp.exp(-mean_d)
    return density / jnp.sum(density, axis=-1, keepdims=True)


@functools.partial(jax.jit, static_argnames=("sample_num",))
def _sample_indices(keys, prob, *, sample_num):
    """Batched: 3x multinomial-without-replacement (Gumbel top-k), torch.unique
    emulation (sorted, static-shaped), randperm fallback — vmapped over batch."""
    n = prob.shape[-1]

    def one(kb, prob_b):
        k0, k1, k2, k3 = jax.random.split(kb, 4)
        logp = jnp.log(prob_b)
        draws = []
        for kd in (k0, k1, k2):
            g = jax.random.gumbel(kd, (n,), dtype=jnp.float32)
            _, di = jax.lax.top_k(logp + g, sample_num)
            draws.append(di)
        combined = jnp.concatenate(draws)                       # (3 * sample_num,)
        s = jnp.sort(combined)
        is_first = jnp.concatenate(
            [jnp.ones((1,), dtype=jnp.bool_), s[1:] != s[:-1]])
        uniq = jnp.sort(jnp.where(is_first, s, n))              # sorted unique, n-filled tail
        n_unique = jnp.sum(is_first)
        perm = jax.random.permutation(k3, n)[:sample_num]
        return jnp.where(n_unique > sample_num,                 # torch: strictly greater
                         uniq[:sample_num].astype(jnp.int32),
                         perm.astype(jnp.int32))

    return jax.vmap(one)(keys, prob)


class RandomSampling:
    """JAX/Pallas port of the PyTorch RandomSampling module (forward only)."""

    def __init__(self, ratio=0.5):
        self.ratio = ratio

    def __call__(self, key, xyz, features=None):
        B, N, _ = xyz.shape
        sample_num = max(1, int(N * self.ratio))

        prob = local_density_prob(xyz)                                    # (B, N) Pallas hot path
        keys = jax.random.split(key, B)
        sample_idx = _sample_indices(keys, prob, sample_num=sample_num)   # (B, S)

        new_xyz = jnp.take_along_axis(xyz, sample_idx[..., None], axis=1)
        new_features = (jnp.take_along_axis(features, sample_idx[..., None], axis=1)
                        if features is not None else None)
        return new_xyz, new_features, sample_idx


if __name__ == "__main__":
    key = jax.random.PRNGKey(0)
    kx, kf, ks = jax.random.split(key, 3)

    B, N, C = 2, 16, 8
    xyz = jax.random.normal(kx, (B, N, 3), dtype=jnp.float32)
    features = jax.random.normal(kf, (B, N, C), dtype=jnp.float32)

    # Check the Pallas hot path against a plain-jnp reference.
    prob = local_density_prob(xyz)
    d_ref = jnp.sqrt(jnp.maximum(
        jnp.sum((xyz[:, :, None, :] - xyz[:, None, :, :]) ** 2, axis=-1), 0.0))
    m_ref = jnp.mean(d_ref, axis=2)
    dens_ref = jnp.exp(-(m_ref - jnp.min(m_ref, axis=1, keepdims=True)))
    prob_ref = dens_ref / jnp.sum(dens_ref, axis=1, keepdims=True)
    assert bool(jnp.allclose(prob, prob_ref, rtol=1e-4, atol=1e-5)), "prob mismatch"

    # Exercise the multi-tile / symmetric-pair path too (N spanning >1 tile).
    xyz_big = jax.random.normal(kx, (1, 400, 3), dtype=jnp.float32)
    prob_big = local_density_prob(xyz_big, tile=128)
    d_big = jnp.sqrt(jnp.maximum(
        jnp.sum((xyz_big[:, :, None, :] - xyz_big[:, None, :, :]) ** 2, axis=-1), 0.0))
    m_big = jnp.mean(d_big, axis=2)
    dens_big = jnp.exp(-(m_big - jnp.min(m_big, axis=1, keepdims=True)))
    prob_big_ref = dens_big / jnp.sum(dens_big, axis=1, keepdims=True)
    assert bool(jnp.allclose(prob_big, prob_big_ref, rtol=1e-4, atol=1e-5)), "multi-tile mismatch"

    module = RandomSampling(ratio=0.5)
    new_xyz, new_features, sample_idx = module(ks, xyz, features)
    jax.block_until_ready((new_xyz, new_features, sample_idx))

    sample_num = max(1, int(N * 0.5))
    assert new_xyz.shape == (B, sample_num, 3)
    assert new_features.shape == (B, sample_num, C)
    assert sample_idx.shape == (B, sample_num)
    for b in range(B):
        assert bool(jnp.allclose(new_xyz[b], xyz[b][sample_idx[b]]))
        assert bool(jnp.allclose(new_features[b], features[b][sample_idx[b]]))

    print("KERNEL_OK")
</pallas_src>

<mosaic_0001>
module attributes {stable_mosaic.version = 11 : i64} {
  func.func @_dist_pairsum_kernel(%arg0: i32, %arg1: i32, %arg2: memref<1xi32, #tpu.memory_space<smem>>, %arg3: memref<1xi32, #tpu.memory_space<smem>>, %arg4: memref<1x128x8xf32, #tpu.memory_space<vmem>>, %arg5: memref<1x8x128xf32, #tpu.memory_space<vmem>>, %arg6: memref<1x1x1x128xf32, #tpu.memory_space<vmem>>, %arg7: memref<1x1x128xf32, #tpu.memory_space<vmem>>) attributes {dimension_semantics = [#tpu.dimension_semantics<parallel>, #tpu.dimension_semantics<arbitrary>], iteration_bounds = array<i64: 2, 1>, scalar_prefetch = 2 : i64, scratch_operands = 1 : i64, tpu.core_type = #tpu.core_type<tc>, window_params = [{transform_indices = @transform_0, window_bounds = array<i64: 1, 128, 8>}, {transform_indices = @transform_1, window_bounds = array<i64: 1, 8, 128>}, {transform_indices = @transform_2, window_bounds = array<i64: 1, 1, 1, 128>}]} {
    %c0_i32 = arith.constant 0 : i32
    %0 = arith.cmpi eq, %arg1, %c0_i32 : i32
    %1 = arith.extui %0 : i1 to i32
    %c0_i32_0 = arith.constant 0 : i32
    %2 = arith.cmpi ne, %1, %c0_i32_0 : i32
    scf.if %2 {
      %cst_15 = arith.constant 0.000000e+00 : f32
      %31 = vector.broadcast %cst_15 : f32 to vector<1x1x128xf32>
      %c0_16 = arith.constant 0 : index
      %c0_17 = arith.constant 0 : index
      %c0_18 = arith.constant 0 : index
      %32 = vector.load %arg7[%c0_16, %c0_17, %c0_18] : memref<1x1x128xf32, #tpu.memory_space<vmem>>, vector<1x1x128xf32>
      tpu.vector_store %arg7[%c0_16, %c0_17, %c0_18], %31 {strides = array<i32>} : memref<1x1x128xf32, #tpu.memory_space<vmem>>, vector<1x1x128xf32>,
    } else {
    }
    %3 = arith.index_cast %arg1 : i32 to index
    %4 = memref.load %arg2[%3] : memref<1xi32, #tpu.memory_space<smem>>
    %5 = arith.index_cast %arg1 : i32 to index
    %6 = memref.load %arg3[%5] : memref<1xi32, #tpu.memory_space<smem>>
    %c0 = arith.constant 0 : index
    %c0_1 = arith.constant 0 : index
    %c0_2 = arith.constant 0 : index
    %7 = vector.load %arg4[%c0, %c0_1, %c0_2] : memref<1x128x8xf32, #tpu.memory_space<vmem>>, vector<1x128x8xf32>
    %8 = vector.shape_cast %7 : vector<1x128x8xf32> to vector<128x8xf32>
    %c0_3 = arith.constant 0 : index
    %c0_4 = arith.constant 0 : index
    %c0_5 = arith.constant 0 : index
    %9 = vector.load %arg5[%c0_3, %c0_4, %c0_5] : memref<1x8x128xf32, #tpu.memory_space<vmem>>, vector<1x8x128xf32>
    %10 = vector.shape_cast %9 : vector<1x8x128xf32> to vector<8x128xf32>
    %cst = arith.constant dense<0.000000e+00> : vector<128x128xf32>
    %11 = tpu.matmul %8, %10, %cst {dimension_numbers = #tpu.dot_dimension_numbers<[1], [0], [0], [1], [0, 0, 1, 1], [], []>, precision = #tpu.contract_precision<fp32>} : vector<128x8xf32>, vector<8x128xf32>, vector<128x128xf32> -> vector<128x128xf32>
    %cst_6 = arith.constant 0.000000e+00 : f32
    %12 = vector.broadcast %cst_6 : f32 to vector<128x128xf32>
    %13 = arith.maximumf %11, %12 : vector<128x128xf32>
    %14 = math.sqrt %13 : vector<128x128xf32>
    %15 = arith.index_cast %6 : i32 to index
    %c0_7 = arith.constant 0 : index
    %c0_8 = arith.constant 0 : index
    %16 = vector.load %arg7[%15, %c0_7, %c0_8] : memref<1x1x128xf32, #tpu.memory_space<vmem>>, vector<1x1x128xf32>
    %17 = vector.shape_cast %16 : vector<1x1x128xf32> to vector<1x128xf32>
    %cst_9 = arith.constant dense<0.000000e+00> : vector<128xf32>
    %18 = vector.multi_reduction <add>, %14, %cst_9 [0] : vector<128x128xf32> to vector<128xf32>
    %19 = vector.shape_cast %18 : vector<128xf32> to vector<1x128xf32>
    %20 = arith.addf %17, %19 : vector<1x128xf32>
    %21 = arith.index_cast %6 : i32 to index
    %c0_10 = arith.constant 0 : index
    %c0_11 = arith.constant 0 : index
    %22 = vector.load %arg7[%21, %c0_10, %c0_11] : memref<1x1x128xf32, #tpu.memory_space<vmem>>, vector<1x1x128xf32>
    %23 = vector.shape_cast %22 : vector<1x1x128xf32> to vector<1x128xf32>
    %24 = vector.shape_cast %20 : vector<1x128xf32> to vector<1x1x128xf32>
    tpu.vector_store %arg7[%21, %c0_10, %c0_11], %24 {strides = array<i32>} : memref<1x1x128xf32, #tpu.memory_space<vmem>>, vector<1x1x128xf32>,
    %25 = arith.cmpi ne, %4, %6 : i32
    %26 = arith.extui %25 : i1 to i32
    %c0_i32_12 = arith.constant 0 : i32
    %27 = arith.cmpi ne, %26, %c0_i32_12 : i32
    scf.if %27 {
      %31 = arith.index_cast %4 : i32 to index
      %c0_15 = arith.constant 0 : index
      %c0_16 = arith.constant 0 : index
      %32 = vector.load %arg7[%31, %c0_15, %c0_16] : memref<1x1x128xf32, #tpu.memory_space<vmem>>, vector<1x1x128xf32>
      %33 = vector.shape_cast %32 : vector<1x1x128xf32> to vector<1x128xf32>
      %cst_17 = arith.constant dense<0.000000e+00> : vector<128xf32>
      %34 = vector.multi_reduction <add>, %14, %cst_17 [1] : vector<128x128xf32> to vector<128xf32>
      %35 = vector.shape_cast %34 : vector<128xf32> to vector<1x128xf32>
      %36 = arith.addf %33, %35 : vector<1x128xf32>
      %37 = arith.index_cast %4 : i32 to index
      %c0_18 = arith.constant 0 : index
      %c0_19 = arith.constant 0 : index
      %38 = vector.load %arg7[%37, %c0_18, %c0_19] : memref<1x1x128xf32, #tpu.memory_space<vmem>>, vector<1x1x128xf32>
      %39 = vector.shape_cast %38 : vector<1x1x128xf32> to vector<1x128xf32>
      %40 = vector.shape_cast %36 : vector<1x128xf32> to vector<1x1x128xf32>
      tpu.vector_store %arg7[%37, %c0_18, %c0_19], %40 {strides = array<i32>} : memref<1x1x128xf32, #tpu.memory_space<vmem>>, vector<1x1x128xf32>,
    } else {
    }
    %c0_i32_13 = arith.constant 0 : i32
    %28 = arith.cmpi eq, %arg1, %c0_i32_13 : i32
    %29 = arith.extui %28 : i1 to i32
    %c0_i32_14 = arith.constant 0 : i32
    %30 = arith.cmpi ne, %29, %c0_i32_14 : i32
    scf.if %30 {
      %c0_15 = arith.constant 0 : index
      %c0_16 = arith.constant 0 : index
      %c0_17 = arith.constant 0 : index
      %31 = vector.load %arg7[%c0_15, %c0_16, %c0_17] : memref<1x1x128xf32, #tpu.memory_space<vmem>>, vector<1x1x128xf32>
      %c0_18 = arith.constant 0 : index
      %c0_19 = arith.constant 0 : index
      %c0_20 = arith.constant 0 : index
      %c0_21 = arith.constant 0 : index
      %32 = vector.load %arg6[%c0_18, %c0_19, %c0_20, %c0_21] : memref<1x1x1x128xf32, #tpu.memory_space<vmem>>, vector<1x1x1x128xf32>
      %33 = vector.shape_cast %32 : vector<1x1x1x128xf32> to vector<1x1x128xf32>
      %34 = vector.shape_cast %31 : vector<1x1x128xf32> to vector<1x1x1x128xf32>
      tpu.vector_store %arg6[%c0_18, %c0_19, %c0_20, %c0_21], %34 {strides = array<i32>} : memref<1x1x1x128xf32, #tpu.memory_space<vmem>>, vector<1x1x1x128xf32>,
    } else {
    }
    return
  }
  func.func @transform_0(%arg0: i32, %arg1: i32, %arg2: memref<1xi32, #tpu.memory_space<smem>>, %arg3: memref<1xi32, #tpu.memory_space<smem>>) -> (i32, i32, i32) {
    %0 = arith.index_cast %arg1 : i32 to index
    %1 = memref.load %arg2[%0] : memref<1xi32, #tpu.memory_space<smem>>
    %c0_i32 = arith.constant 0 : i32
    %c0_i32_0 = arith.constant 0 : i32
    return %arg0, %1, %c0_i32 : i32, i32, i32
  }
  func.func @transform_1(%arg0: i32, %arg1: i32, %arg2: memref<1xi32, #tpu.memory_space<smem>>, %arg3: memref<1xi32, #tpu.memory_space<smem>>) -> (i32, i32, i32) {
    %0 = arith.index_cast %arg1 : i32 to index
    %1 = memref.load %arg3[%0] : memref<1xi32, #tpu.memory_space<smem>>
    %c0_i32 = arith.constant 0 : i32
    %c0_i32_0 = arith.constant 0 : i32
    return %arg0, %c0_i32, %1 : i32, i32, i32
  }
  func.func @transform_2(%arg0: i32, %arg1: i32, %arg2: memref<1xi32, #tpu.memory_space<smem>>, %arg3: memref<1xi32, #tpu.memory_space<smem>>) -> (i32, i32, i32, i32) {
    %c0_i32 = arith.constant 0 : i32
    %c0_i32_0 = arith.constant 0 : i32
    %c0_i32_1 = arith.constant 0 : i32
    %c0_i32_2 = arith.constant 0 : i32
    return %arg0, %c0_i32, %c0_i32_0, %c0_i32_1 : i32, i32, i32, i32
  }
}

</mosaic_0001>

<llo_original>
// kernel: local_density_prob.1
$region0: #{local_density_prob.1}
  #allocation0 [shape = 'u32[]', space=smem, size = 0x4, offset = 0x4, fixed_abs, tag = 'smem constant byte address 0x4 - core index']
  #allocation1 [shape = 'u32[144,128]{1,0:T(1,128)}', space=vmem, size = 0x12000, scoped, tag = 'internal scratch']
  #allocation2 [shape = 'f32[1,1,128]{2,1,0:T(1,128)}', space=vmem, size = 0x200, scoped, tag = 'scratch operand']
  #allocation3 [shape = 's32[1]{0}', space=sflag, size = 0x4, scoped, tag = 'scoped memory for local_density_prob.1']
  #allocation4 [shape = 's32[1]{0:T(128)S(6)}', space=smem, size = 0x200, scoped, tag = 'prefetched SMEM operand 0']
  #allocation5 [shape = 's32[1]{0:T(128)S(6)}', space=smem, size = 0x200, scoped, tag = 'prefetched SMEM operand 1']
  %s0 = inlined_call_operand.<no memory space> [shape: s32[1], index: 0, kind: input, shape index: {}, may-alias: {0,1}]
  %s1 = inlined_call_operand.<no memory space> [shape: s32[1], index: 1, kind: input, shape index: {}, may-alias: {0,1}]
  %s2 = inlined_call_operand.vmem [shape: f32[2,128,8], index: 2, kind: input, shape index: {}]
  %s3 = inlined_call_operand.vmem [shape: f32[2,8,128], index: 3, kind: input, shape index: {}]
  %s4 = inlined_call_operand.vmem [shape: f32[2,1,1,128], index: 4, kind: output, shape index: {}]
  %s5 = sld [smem:[#allocation0]]
  $region53: #{local_density_prob.1} parent=0
    _
  %s7 = ssub.s32 1, %s5
  %s8 = scalar_select 0, %s7, %s5
  %9 = sst [smem:[#allocation4]] %s0
  %10 = sst [smem:[#allocation5]] %s1
  loop: start=0, step=1, limit=4
  $region2: #{local_density_prob.1} parent=0 // loop_pre_header
    _
  $region3: #{local_density_prob.1} parent=0 // loop_header
    %s12 = sphi 0, %s16
    %p13 = scmp.ge.s32.totalorder %s12, 4
    %s19 = sphi 0, %s31
    %s20 = sphi 0, %s27
    %s21 = sphi 0, %s19
    %s22 = sphi 0, %s20
    %s23 = sphi 0, %s21
    %s24 = sphi 0, %s22
    %s38 = sphi 0, %s40
    %s41 = sphi 0, %s38
    %s42 = sphi 0, %s41
    %s58 = sphi 0, %s42
    %s68 = sphi 0, %s70
    %s71 = sphi 0, %s68
    %s72 = sphi 0, %s71
    %s88 = sphi 0, %s72
    %s94 = sphi 0, %s96
    %s97 = sphi 0, %s94
    %s98 = sphi 0, %s97
    %s114 = sphi 0, %s98
  $region4: #{local_density_prob.1} parent=0 // loop_header_branch
    %15 = sbr.rel (%p13) target = $region8
  $region5: #{local_density_prob.1} parent=0 // loop_body
    %s17 = ssub.s32 %s12, 1
    %s18 = ssub.s32 %s12, 2
    %s25 = sadd.s32 1, %s20
    %p26 = scmp.ge.s32.totalorder %s25, 1
    %s27 = scalar_select %p26, 0, %s25
    %s28 = sadd.s32 1, %s19
    %s29 = scalar_select %p26, %s28, %s19
    %p30 = scmp.ge.s32.totalorder %s29, 2
    %s31 = scalar_select %p30, 0, %s29
    %s32 = sld [smem:[#allocation4 + %s20]]
    %s33 = sld [smem:[#allocation4 + %s27]]
    %s34 = ssub.s32 %s19, %s31
    %s35 = ssub.s32 %s32, %s33
    %s36 = sor.u32 %s34, %s35
    %p37 = scmp.eq.s32.totalorder %s36, 0
    %s39 = sadd.s32 %s38, 1
    %s40 = scalar_select %p37, %s38, %s39
    %p43 = pneg %p37
    %p44 = scmp.eq.s32.totalorder %s12, 1
    %p45 = por %p43, %p44
    %p46 = scmp.ne.s32.totalorder %s38, %s41
    %p47 = scmp.eq.s32.totalorder %s12, 0
    %p48 = por %p46, %p47
    %p49 = scmp.ne.s32.totalorder %s38, %s41
    %p50 = scmp.eq.s32.totalorder %s17, 1
    %p51 = por %p49, %p50
    %p52 = scmp.ne.s32.totalorder %s41, %s42
    %p53 = scmp.eq.s32.totalorder %s17, 0
    %p54 = por %p52, %p53
    %p55 = scmp.ne.s32.totalorder %s41, %s42
    %p56 = scmp.eq.s32.totalorder %s18, 1
    %p57 = por %p55, %p56
    %p59 = scmp.ne.s32.totalorder %s42, %s58
    %p60 = scmp.eq.s32.totalorder %s18, 0
    %p61 = por %p59, %p60
    %s62 = sld [smem:[#allocation5 + %s20]]
    %s63 = sld [smem:[#allocation5 + %s27]]
    %s64 = ssub.s32 %s19, %s31
    %s65 = ssub.s32 %s62, %s63
    %s66 = sor.u32 %s64, %s65
    %p67 = scmp.eq.s32.totalorder %s66, 0
    %s69 = sadd.s32 %s68, 1
    %s70 = scalar_select %p67, %s68, %s69
    %p73 = pneg %p67
    %p74 = scmp.eq.s32.totalorder %s12, 1
    %p75 = por %p73, %p74
    %p76 = scmp.ne.s32.totalorder %s68, %s71
    %p77 = scmp.eq.s32.totalorder %s12, 0
    %p78 = por %p76, %p77
    %p79 = scmp.ne.s32.totalorder %s68, %s71
    %p80 = scmp.eq.s32.totalorder %s17, 1
    %p81 = por %p79, %p80
    %p82 = scmp.ne.s32.totalorder %s71, %s72
    %p83 = scmp.eq.s32.totalorder %s17, 0
    %p84 = por %p82, %p83
    %p85 = scmp.ne.s32.totalorder %s71, %s72
    %p86 = scmp.eq.s32.totalorder %s18, 1
    %p87 = por %p85, %p86
    %p89 = scmp.ne.s32.totalorder %s72, %s88
    %p90 = scmp.eq.s32.totalorder %s18, 0
    %p91 = por %p89, %p90
    %s92 = ssub.s32 %s19, %s31
    %p93 = scmp.eq.s32.totalorder %s92, 0
    %s95 = sadd.s32 %s94, 1
    %s96 = scalar_select %p93, %s94, %s95
    %p99 = pneg %p93
    %p100 = scmp.eq.s32.totalorder %s12, 1
    %p101 = por %p99, %p100
    %p102 = scmp.ne.s32.totalorder %s94, %s97
    %p103 = scmp.eq.s32.totalorder %s12, 0
    %p104 = por %p102, %p103
    %p105 = scmp.ne.s32.totalorder %s94, %s97
    %p106 = scmp.eq.s32.totalorder %s17, 1
    %p107 = por %p105, %p106
    %p108 = scmp.ne.s32.totalorder %s97, %s98
    %p109 = scmp.eq.s32.totalorder %s17, 0
    %p110 = por %p108, %p109
    %p111 = scmp.ne.s32.totalorder %s97, %s98
    %p112 = scmp.eq.s32.totalorder %s18, 1
    %p113 = por %p111, %p112
    %p115 = scmp.ne.s32.totalorder %s98, %s114
    %p116 = scmp.eq.s32.totalorder %s18, 0
    %p117 = por %p115, %p116
    %p118 = scmp.le.s32.totalorder 1, %s12
    %p119 = scmp.lt.s32.totalorder %s12, 3
    %p120 = pnand %p118, %p119
    %p121 = pneg %p120
    // Predicated region
    $region9: #{local_density_prob.1} parent=5 // pred_check
      _
    $region10: #{local_density_prob.1} parent=5 // pred_check_branch
      %123 = sbr.rel (%p120) target = $region12
    $region11: #{local_density_prob.1} parent=5 // pred_region
      %s124 = ssub.s32 %s12, 1
    $region12: #{local_density_prob.1} parent=5 // pred_fallthru
      _
    %p125 = scmp.lt.s32.totalorder %s12, 2
    // Predicated region
    $region13: #{local_density_prob.1} parent=5 // pred_check
      %p126 = pneg %p125
    $region14: #{local_density_prob.1} parent=5 // pred_check_branch
      %128 = sbr.rel (%p126) target = $region16
    $region15: #{local_density_prob.1} parent=5 // pred_region
      // Predicated region
      $region17: #{local_density_prob.1} parent=15 // pred_check
        %p129 = pneg %p48
      $region18: #{local_density_prob.1} parent=15 // pred_check_branch
        %131 = sbr.rel (%p129) target = $region20
      $region19: #{local_density_prob.1} parent=15 // pred_region
        %s132 = sld [smem:[#allocation4 + %s20]]
        %s133 = smul.u32 16, %s132
        %p134 = scmp.lt.s32.totalorder %s19, 1
        %s135 = scalar_select %p134, %s19, 1
        %p136 = scmp.lt.s32.totalorder %s133, 15
        %s137 = scalar_select %p136, %s133, 15
        %s138 = smul.addr %s135, 16
        %s139 = sadd.s32 %s137, %s138
        %s140 = smul.addr %s139, 8
        %s141 = scalar_lea.vmem %s2, %s140
        %s142 = sld [smem:[#allocation4 + %s20]]
        %s143 = smul.u32 16, %s142
      $region20: #{local_density_prob.1} parent=15 // pred_fallthru
        _
      // Predicated region
      $region21: #{local_density_prob.1} parent=15 // pred_check
        %p144 = pneg %p78
      $region22: #{local_density_prob.1} parent=15 // pred_check_branch
        %146 = sbr.rel (%p144) target = $region24
      $region23: #{local_density_prob.1} parent=15 // pred_region
        %s147 = sld [smem:[#allocation5 + %s20]]
        %p148 = scmp.lt.s32.totalorder %s19, 1
        %s149 = scalar_select %p148, %s19, 1
        %p150 = scmp.lt.s32.totalorder %s147, 0
        %s151 = scalar_select %p150, %s147, 0
        %s152 = sadd.s32 %s151, %s149
        %s153 = smul.addr %s152, 8
        %s154 = scalar_lea.vmem %s3, %s153
        %s155 = sld [smem:[#allocation5 + %s20]]
      $region24: #{local_density_prob.1} parent=15 // pred_fallthru
        _
    $region16: #{local_density_prob.1} parent=5 // pred_fallthru
      _
    %p156 = scmp.le.s32.totalorder 1, %s12
    %p157 = scmp.lt.s32.totalorder %s12, 3
    %p158 = pnand %p156, %p157
    %p159 = pneg %p158
    // Predicated region
    $region25: #{local_density_prob.1} parent=5 // pred_check
      _
    $region26: #{local_density_prob.1} parent=5 // pred_check_branch
      %161 = sbr.rel (%p158) target = $region28
    $region27: #{local_density_prob.1} parent=5 // pred_region
      %s162 = ssub.s32 %s12, 1
      %s163 = sld [smem:[#allocation4 + %s22]]
      %s164 = smul.u32 16, %s163
      %p165 = scmp.lt.s32.totalorder %s21, 1
      %s166 = scalar_select %p165, %s21, 1
      %p167 = scmp.lt.s32.totalorder %s164, 15
      %s168 = scalar_select %p167, %s164, 15
      %s169 = smul.addr %s166, 16
      %s170 = sadd.s32 %s168, %s169
      %s171 = smul.addr %s170, 8
      %s172 = scalar_lea.vmem %s2, %s171
      %p173 = pneg %p54
      %p174 = pneg %p51
      %s175 = sld [smem:[#allocation5 + %s22]]
      %p176 = scmp.lt.s32.totalorder %s21, 1
      %s177 = scalar_select %p176, %s21, 1
      %p178 = scmp.lt.s32.totalorder %s175, 0
      %s179 = scalar_select %p178, %s175, 0
      %s180 = sadd.s32 %s179, %s177
      %s181 = smul.addr %s180, 8
      %s182 = scalar_lea.vmem %s3, %s181
      %p183 = pneg %p84
      %p184 = pneg %p81
      %p185 = pneg %p110
      %p186 = pneg %p107
      %p187 = scmp.lt.s32.totalorder %s21, 1
      %s188 = scalar_select %p187, %s21, 1
      %s189 = scalar_lea.vmem %s4, %s188
      %s190 = sld [smem:[#allocation4 + %s22]]
      %s191 = smul.u32 16, %s190
      %p192 = scmp.lt.s32.totalorder %s21, 1
      %s193 = scalar_select %p192, %s21, 1
      %p194 = scmp.lt.s32.totalorder %s191, 15
      %s195 = scalar_select %p194, %s191, 15
      %s196 = smul.addr %s193, 16
      %s197 = sadd.s32 %s195, %s196
      %s198 = smul.addr %s197, 8
      %s199 = scalar_lea.vmem %s2, %s198
      %s200 = sld [smem:[#allocation4 + %s22]]
      %s201 = smul.u32 16, %s200
      %s202 = sld [smem:[#allocation5 + %s22]]
      %p203 = scmp.lt.s32.totalorder %s21, 1
      %s204 = scalar_select %p203, %s21, 1
      %p205 = scmp.lt.s32.totalorder %s202, 0
      %s206 = scalar_select %p205, %s202, 0
      %s207 = sadd.s32 %s206, %s204
      %s208 = smul.addr %s207, 8
      %s209 = scalar_lea.vmem %s3, %s208
      %s210 = sld [smem:[#allocation5 + %s22]]
      %p211 = scmp.lt.s32.totalorder %s21, 1
      %s212 = scalar_select %p211, %s21, 1
      %s213 = scalar_lea.vmem %s4, %s212
      %p214 = scmp.eq.s32.totalorder %s22, 0
      // Predicated region
      $region29: #{local_density_prob.1} parent=27 // pred_check
        %p215 = pneg %p214
      $region30: #{local_density_prob.1} parent=27 // pred_check_branch
        %217 = sbr.rel (%p215) target = $region32
      $region31: #{local_density_prob.1} parent=27 // pred_region
        %218 = vst [vmem:[#allocation2] sm:$0x1] 0.0
      $region32: #{local_density_prob.1} parent=27 // pred_fallthru
        _
      %s219 = sld [smem:[#allocation4 + %s22]]
      %s220 = sld [smem:[#allocation5 + %s22]]
      %v221 = vld [vmem:[%s199] sm:$0xff]
      %v222 = vld [vmem:[%s199 + $0x8] sm:$0xff]
      %v223 = vld [vmem:[%s199 + $0x10] sm:$0xff]
      %v224 = vld [vmem:[%s199 + $0x18] sm:$0xff]
      %v225 = vld [vmem:[%s199 + $0x20] sm:$0xff]
      %v226 = vld [vmem:[%s199 + $0x28] sm:$0xff]
      %v227 = vld [vmem:[%s199 + $0x30] sm:$0xff]
      %v228 = vld [vmem:[%s199 + $0x38] sm:$0xff]
      %v229 = vld [vmem:[%s199 + $0x40] sm:$0xff]
      %v230 = vld [vmem:[%s199 + $0x48] sm:$0xff]
      %v231 = vld [vmem:[%s199 + $0x50] sm:$0xff]
      %v232 = vld [vmem:[%s199 + $0x58] sm:$0xff]
      %v233 = vld [vmem:[%s199 + $0x60] sm:$0xff]
      %v234 = vld [vmem:[%s199 + $0x68] sm:$0xff]
      %v235 = vld [vmem:[%s199 + $0x70] sm:$0xff]
      %v236 = vld [vmem:[%s199 + $0x78] sm:$0xff]
      %v237 = vld [vmem:[%s209] sm:$0xff]
      %vm238 = vcmask 64512
      %v240 = vsel %vm238, %v221, 0
      %v243 = vsel %vm238, %v222, 0
      %v246 = vsel %vm238, %v223, 0
      %v249 = vsel %vm238, %v224, 0
      %v252 = vsel %vm238, %v225, 0
      %v255 = vsel %vm238, %v226, 0
      %v258 = vsel %vm238, %v227, 0
      %v261 = vsel %vm238, %v228, 0
      %v264 = vsel %vm238, %v229, 0
      %v267 = vsel %vm238, %v230, 0
      %v270 = vsel %vm238, %v231, 0
      %v273 = vsel %vm238, %v232, 0
      %v276 = vsel %vm238, %v233, 0
      %v279 = vsel %vm238, %v234, 0
      %v282 = vsel %vm238, %v235, 0
      %v285 = vsel %vm238, %v236, 0
      %287 = vmatprep.subr.mxu0 0.0
      %v288 = vand.u32 %v237, 4294901760
      %289 = vmatpush1.msra.mxu0 %v288
      %290 = vmatprep.subr.mxu0 0.0
      %291 = vmatpush1.msra.mxu0 0.0
      %292 = vmatprep.subr.mxu0 0.0
      %293 = vmatpush1.msra.mxu0 0.0
      %294 = vmatprep.subr.mxu0 0.0
      %295 = vmatpush1.msra.mxu0 0.0
      %296 = vmatprep.subr.mxu0 0.0
      %297 = vmatpush1.msra.mxu0 0.0
      %298 = vmatprep.subr.mxu0 0.0
      %299 = vmatpush1.msra.mxu0 0.0
      %300 = vmatprep.subr.mxu0 0.0
      %301 = vmatpush1.msra.mxu0 0.0
      %302 = vmatprep.subr.mxu0 0.0
      %303 = vmatpush1.msra.mxu0 0.0
      %304 = vmatprep.subr.mxu0 0.0
      %305 = vmatpush1.msra.mxu0 0.0
      %306 = vmatprep.subr.mxu0 0.0
      %307 = vmatpush1.msra.mxu0 0.0
      %308 = vmatprep.subr.mxu0 0.0
      %309 = vmatpush1.msra.mxu0 0.0
      %310 = vmatprep.subr.mxu0 0.0
      %311 = vmatpush1.msra.mxu0 0.0
      %312 = vmatprep.subr.mxu0 0.0
      %313 = vmatpush1.msra.mxu0 0.0
      %314 = vmatprep.subr.mxu0 0.0
      %315 = vmatpush1.msra.mxu0 0.0
      %316 = vmatprep.subr.mxu0 0.0
      %317 = vmatpush1.msra.mxu0 0.0
      %318 = vmatprep.subr.mxu0 0.0
      %319 = vmatpush1.msra.mxu0 0.0
      %320 = vmatprep.subr.mxu0 0.0
      %321 = vmatpush1.msra.mxu0 0.0
      %322 = vmatprep.subr.mxu0 0.0
      %323 = vmatpush1.msra.mxu0 0.0
      %324 = vmatprep.subr.mxu0 0.0
      %325 = vmatpush1.msra.mxu0 0.0
      %326 = vmatprep.subr.mxu0 0.0
      %327 = vmatpush1.msra.mxu0 0.0
      %328 = vmatprep.subr.mxu0 0.0
      %329 = vmatpush1.msra.mxu0 0.0
      %330 = vmatprep.subr.mxu0 0.0
      %331 = vmatpush1.msra.mxu0 0.0
      %332 = vmatprep.subr.mxu0 0.0
      %333 = vmatpush1.msra.mxu0 0.0
      %334 = vmatprep.subr.mxu0 0.0
      %335 = vmatpush1.msra.mxu0 0.0
      %336 = vmatprep.subr.mxu0 0.0
      %337 = vmatpush1.msra.mxu0 0.0
      %338 = vmatprep.subr.mxu0 0.0
      %339 = vmatpush1.msra.mxu0 0.0
      %340 = vmatprep.subr.mxu0 0.0
      %341 = vmatpush1.msra.mxu0 0.0
      %342 = vmatprep.subr.mxu0 0.0
      %343 = vmatpush1.msra.mxu0 0.0
      %344 = vmatprep.subr.mxu0 0.0
      %345 = vmatpush1.msra.mxu0 0.0
      %346 = vmatprep.subr.mxu0 0.0
      %347 = vmatpush1.msra.mxu0 0.0
      %348 = vmatprep.subr.mxu0 0.0
      %349 = vmatpush1.msra.mxu0 0.0
      %350 = vmatprep.subr.mxu0 0.0
      %351 = vmatpush1.msra.mxu0 0.0
      %352 = vmatprep.mubr.f32.mxu0 0.0
      %v353 = vand.u32 %v240, 4294901760
      %v354 = vsub.f32 %v240, %v353
      %v355 = vand.u32 %v354, 4294901760
      %v356 = vsub.f32 %v354, %v355
      %v357 = vand.u32 %v356, 4294901760
      %358 = vmatmul.mubr.f32.gmra.mrb[0].mxu0 %v357
      %v359 = vpop.f32.mrb[0].mxu0
      %v360 = vadd.f32 0.0, %v359
      %v361 = vpop.f32.mrb[0].mxu0
      %362 = vmatprep.mubr.f32.mxu0 0.0
      %v363 = vand.u32 %v243, 4294901760
      %v364 = vsub.f32 %v243, %v363
      %v365 = vand.u32 %v364, 4294901760
      %v366 = vsub.f32 %v364, %v365
      %v367 = vand.u32 %v366, 4294901760
      %368 = vmatmul.mubr.f32.gmra.mrb[0].mxu0 %v367
      %v369 = vpop.f32.mrb[0].mxu0
      %v370 = vadd.f32 0.0, %v369
      %v371 = vpop.f32.mrb[0].mxu0
      %372 = vmatprep.mubr.f32.mxu0 0.0
      %v373 = vand.u32 %v246, 4294901760
      %v374 = vsub.f32 %v246, %v373
      %v375 = vand.u32 %v374, 4294901760
      %v376 = vsub.f32 %v374, %v375
      %v377 = vand.u32 %v376, 4294901760
      %378 = vmatmul.mubr.f32.gmra.mrb[0].mxu0 %v377
      %v379 = vpop.f32.mrb[0].mxu0
      %v380 = vadd.f32 0.0, %v379
      %v381 = vpop.f32.mrb[0].mxu0
      %382 = vmatprep.mubr.f32.mxu0 0.0
      %v383 = vand.u32 %v249, 4294901760
      %v384 = vsub.f32 %v249, %v383
      %v385 = vand.u32 %v384, 4294901760
      %v386 = vsub.f32 %v384, %v385
      %v387 = vand.u32 %v386, 4294901760
      %388 = vmatmul.mubr.f32.gmra.mrb[0].mxu0 %v387
      %v389 = vpop.f32.mrb[0].mxu0
      %v390 = vadd.f32 0.0, %v389
      %v391 = vpop.f32.mrb[0].mxu0
      %392 = vmatprep.mubr.f32.mxu0 0.0
      %v393 = vand.u32 %v252, 4294901760
      %v394 = vsub.f32 %v252, %v393
      %v395 = vand.u32 %v394, 4294901760
      %v396 = vsub.f32 %v394, %v395
      %v397 = vand.u32 %v396, 4294901760
      %398 = vmatmul.mubr.f32.gmra.mrb[0].mxu0 %v397
      %v399 = vpop.f32.mrb[0].mxu0
      %v400 = vadd.f32 0.0, %v399
      %v401 = vpop.f32.mrb[0].mxu0
      %402 = vmatprep.mubr.f32.mxu0 0.0
      %v403 = vand.u32 %v255, 4294901760
      %v404 = vsub.f32 %v255, %v403
      %v405 = vand.u32 %v404, 4294901760
      %v406 = vsub.f32 %v404, %v405
      %v407 = vand.u32 %v406, 4294901760
      %408 = vmatmul.mubr.f32.gmra.mrb[0].mxu0 %v407
      %v409 = vpop.f32.mrb[0].mxu0
      %v410 = vadd.f32 0.0, %v409
      %v411 = vpop.f32.mrb[0].mxu0
      %412 = vmatprep.mubr.f32.mxu0 0.0
      %v413 = vand.u32 %v258, 4294901760
      %v414 = vsub.f32 %v258, %v413
      %v415 = vand.u32 %v414, 4294901760
      %v416 = vsub.f32 %v414, %v415
      %v417 = vand.u32 %v416, 4294901760
      %418 = vmatmul.mubr.f32.gmra.mrb[0].mxu0 %v417
      %v419 = vpop.f32.mrb[0].mxu0
      %v420 = vadd.f32 0.0, %v419
      %v421 = vpop.f32.mrb[0].mxu0
      %422 = vmatprep.mubr.f32.mxu0 0.0
      %v423 = vand.u32 %v261, 4294901760
      %v424 = vsub.f32 %v261, %v423
      %v425 = vand.u32 %v424, 4294901760
      %v426 = vsub.f32 %v424, %v425
      %v427 = vand.u32 %v426, 4294901760
      %428 = vmatmul.mubr.f32.gmra.mrb[0].mxu0 %v427
      %v429 = vpop.f32.mrb[0].mxu0
      %v430 = vadd.f32 0.0, %v429
      %v431 = vpop.f32.mrb[0].mxu0
      %432 = vmatprep.mubr.f32.mxu0 0.0
      %v433 = vand.u32 %v264, 4294901760
      %v434 = vsub.f32 %v264, %v433
      %v435 = vand.u32 %v434, 4294901760
      %v436 = vsub.f32 %v434, %v435
      %v437 = vand.u32 %v436, 4294901760
      %438 = vmatmul.mubr.f32.gmra.mrb[0].mxu0 %v437
      %v439 = vpop.f32.mrb[0].mxu0
      %v440 = vadd.f32 0.0, %v439
      %v441 = vpop.f32.mrb[0].mxu0
      %442 = vmatprep.mubr.f32.mxu0 0.0
      %v443 = vand.u32 %v267, 4294901760
      %v444 = vsub.f32 %v267, %v443
      %v445 = vand.u32 %v444, 4294901760
      %v446 = vsub.f32 %v444, %v445
      %v447 = vand.u32 %v446, 4294901760
      %448 = vmatmul.mubr.f32.gmra.mrb[0].mxu0 %v447
      %v449 = vpop.f32.mrb[0].mxu0
      %v450 = vadd.f32 0.0, %v449
      %v451 = vpop.f32.mrb[0].mxu0
      %452 = vmatprep.mubr.f32.mxu0 0.0
      %v453 = vand.u32 %v270, 4294901760
      %v454 = vsub.f32 %v270, %v453
      %v455 = vand.u32 %v454, 4294901760
      %v456 = vsub.f32 %v454, %v455
      %v457 = vand.u32 %v456, 4294901760
      %458 = vmatmul.mubr.f32.gmra.mrb[0].mxu0 %v457
      %v459 = vpop.f32.mrb[0].mxu0
      %v460 = vadd.f32 0.0, %v459
      %v461 = vpop.f32.mrb[0].mxu0
      %462 = vmatprep.mubr.f32.mxu0 0.0
      %v463 = vand.u32 %v273, 4294901760
      %v464 = vsub.f32 %v273, %v463
      %v465 = vand.u32 %v464, 4294901760
      %v466 = vsub.f32 %v464, %v465
      %v467 = vand.u32 %v466, 4294901760
      %468 = vmatmul.mubr.f32.gmra.mrb[0].mxu0 %v467
      %v469 = vpop.f32.mrb[0].mxu0
      %v470 = vadd.f32 0.0, %v469
      %v471 = vpop.f32.mrb[0].mxu0
      %472 = vmatprep.mubr.f32.mxu0 0.0
      %v473 = vand.u32 %v276, 4294901760
      %v474 = vsub.f32 %v276, %v473
      %v475 = vand.u32 %v474, 4294901760
      %v476 = vsub.f32 %v474, %v475
      %v477 = vand.u32 %v476, 4294901760
      %478 = vmatmul.mubr.f32.gmra.mrb[0].mxu0 %v477
      %v479 = vpop.f32.mrb[0].mxu0
      %v480 = vadd.f32 0.0, %v479
      %v481 = vpop.f32.mrb[0].mxu0
      %482 = vmatprep.mubr.f32.mxu0 0.0
      %v483 = vand.u32 %v279, 4294901760
      %v484 = vsub.f32 %v279, %v483
      %v485 = vand.u32 %v484, 4294901760
      %v486 = vsub.f32 %v484, %v485
      %v487 = vand.u32 %v486, 4294901760
      %488 = vmatmul.mubr.f32.gmra.mrb[0].mxu0 %v487
      %v489 = vpop.f32.mrb[0].mxu0
      %v490 = vadd.f32 0.0, %v489
      %v491 = vpop.f32.mrb[0].mxu0
      %492 = vmatprep.mubr.f32.mxu0 0.0
      %v493 = vand.u32 %v282, 4294901760
      %v494 = vsub.f32 %v282, %v493
      %v495 = vand.u32 %v494, 4294901760
      %v496 = vsub.f32 %v494, %v495
      %v497 = vand.u32 %v496, 4294901760
      %498 = vmatmul.mubr.f32.gmra.mrb[0].mxu0 %v497
      %v499 = vpop.f32.mrb[0].mxu0
      %v500 = vadd.f32 0.0, %v499
      %v501 = vpop.f32.mrb[0].mxu0
      %502 = vmatprep.mubr.f32.mxu0 0.0
      %v503 = vand.u32 %v285, 4294901760
      %v504 = vsub.f32 %v285, %v503
      %v505 = vand.u32 %v504, 4294901760
      %v506 = vsub.f32 %v504, %v505
      %v507 = vand.u32 %v506, 4294901760
      %508 = vmatmul.mubr.f32.gmra.mrb[0].mxu0 %v507
      %v509 = vpop.f32.mrb[0].mxu0
      %v510 = vadd.f32 0.0, %v509
      %v511 = vpop.f32.mrb[0].mxu0
      %512 = vdwg.mxu0
      %513 = vmatprep.subr.mxu0 0.0
      %v514 = vand.u32 %v237, 4294901760
      %v515 = vsub.f32 %v237, %v514
      %v516 = vand.u32 %v515, 4294901760
      %v517 = vsub.f32 %v515, %v516
      %v518 = vand.u32 %v517, 4294901760
      %519 = vmatpush1.msra.mxu0 %v518
      %520 = vmatprep.subr.mxu0 0.0
      %521 = vmatpush1.msra.mxu0 0.0
      %522 = vmatprep.subr.mxu0 0.0
      %523 = vmatpush1.msra.mxu0 0.0
      %524 = vmatprep.subr.mxu0 0.0
      %525 = vmatpush1.msra.mxu0 0.0
      %526 = vmatprep.subr.mxu0 0.0
      %527 = vmatpush1.msra.mxu0 0.0
      %528 = vmatprep.subr.mxu0 0.0
      %529 = vmatpush1.msra.mxu0 0.0
      %530 = vmatprep.subr.mxu0 0.0
      %531 = vmatpush1.msra.mxu0 0.0
      %532 = vmatprep.subr.mxu0 0.0
      %533 = vmatpush1.msra.mxu0 0.0
      %534 = vmatprep.subr.mxu0 0.0
      %535 = vmatpush1.msra.mxu0 0.0
      %536 = vmatprep.subr.mxu0 0.0
      %537 = vmatpush1.msra.mxu0 0.0
      %538 = vmatprep.subr.mxu0 0.0
      %539 = vmatpush1.msra.mxu0 0.0
      %540 = vmatprep.subr.mxu0 0.0
      %541 = vmatpush1.msra.mxu0 0.0
      %542 = vmatprep.subr.mxu0 0.0
      %543 = vmatpush1.msra.mxu0 0.0
      %544 = vmatprep.subr.mxu0 0.0
      %545 = vmatpush1.msra.mxu0 0.0
      %546 = vmatprep.subr.mxu0 0.0
      %547 = vmatpush1.msra.mxu0 0.0
      %548 = vmatprep.subr.mxu0 0.0
      %549 = vmatpush1.msra.mxu0 0.0
      %550 = vmatprep.subr.mxu0 0.0
      %551 = vmatpush1.msra.mxu0 0.0
      %552 = vmatprep.subr.mxu0 0.0
      %553 = vmatpush1.msra.mxu0 0.0
      %554 = vmatprep.subr.mxu0 0.0
      %555 = vmatpush1.msra.mxu0 0.0
      %556 = vmatprep.subr.mxu0 0.0
      %557 = vmatpush1.msra.mxu0 0.0
      %558 = vmatprep.subr.mxu0 0.0
      %559 = vmatpush1.msra.mxu0 0.0
      %560 = vmatprep.subr.mxu0 0.0
      %561 = vmatpush1.msra.mxu0 0.0
      %562 = vmatprep.subr.mxu0 0.0
      %563 = vmatpush1.msra.mxu0 0.0
      %564 = vmatprep.subr.mxu0 0.0
      %565 = vmatpush1.msra.mxu0 0.0
      %566 = vmatprep.subr.mxu0 0.0
      %567 = vmatpush1.msra.mxu0 0.0
      %568 = vmatprep.subr.mxu0 0.0
      %569 = vmatpush1.msra.mxu0 0.0
      %570 = vmatprep.subr.mxu0 0.0
      %571 = vmatpush1.msra.mxu0 0.0
      %572 = vmatprep.subr.mxu0 0.0
      %573 = vmatpush1.msra.mxu0 0.0
      %574 = vmatprep.subr.mxu0 0.0
      %575 = vmatpush1.msra.mxu0 0.0
      %576 = vmatprep.subr.mxu0 0.0
      %577 = vmatpush1.msra.mxu0 0.0
      %578 = vmatprep.subr.mxu0 0.0
      %579 = vmatpush1.msra.mxu0 0.0
      %580 = vmatprep.subr.mxu0 0.0
      %581 = vmatpush1.msra.mxu0 0.0
      %582 = vmatprep.mubr.f32.mxu0 0.0
      %v583 = vand.u32 %v240, 4294901760
      %584 = vmatmul.mubr.f32.gmra.mrb[0].mxu0 %v583
      %v585 = vpop.f32.mrb[0].mxu0
      %v586 = vadd.f32 %v360, %v585
      %v587 = vpop.f32.mrb[0].mxu0
      %588 = vmatprep.mubr.f32.mxu0 0.0
      %v589 = vand.u32 %v243, 4294901760
      %590 = vmatmul.mubr.f32.gmra.mrb[0].mxu0 %v589
      %v591 = vpop.f32.mrb[0].mxu0
      %v592 = vadd.f32 %v370, %v591
      %v593 = vpop.f32.mrb[0].mxu0
      %594 = vmatprep.mubr.f32.mxu0 0.0
      %v595 = vand.u32 %v246, 4294901760
      %596 = vmatmul.mubr.f32.gmra.mrb[0].mxu0 %v595
      %v597 = vpop.f32.mrb[0].mxu0
      %v598 = vadd.f32 %v380, %v597
      %v599 = vpop.f32.mrb[0].mxu0
      %600 = vmatprep.mubr.f32.mxu0 0.0
      %v601 = vand.u32 %v249, 4294901760
      %602 = vmatmul.mubr.f32.gmra.mrb[0].mxu0 %v601
      %v603 = vpop.f32.mrb[0].mxu0
      %v604 = vadd.f32 %v390, %v603
      %v605 = vpop.f32.mrb[0].mxu0
      %606 = vmatprep.mubr.f32.mxu0 0.0
      %v607 = vand.u32 %v252, 4294901760
      %608 = vmatmul.mubr.f32.gmra.mrb[0].mxu0 %v607
      %v609 = vpop.f32.mrb[0].mxu0
      %v610 = vadd.f32 %v400, %v609
      %v611 = vpop.f32.mrb[0].mxu0
      %612 = vmatprep.mubr.f32.mxu0 0.0
      %v613 = vand.u32 %v255, 4294901760
      %614 = vmatmul.mubr.f32.gmra.mrb[0].mxu0 %v613
      %v615 = vpop.f32.mrb[0].mxu0
      %v616 = vadd.f32 %v410, %v615
      %v617 = vpop.f32.mrb[0].mxu0
      %618 = vmatprep.mubr.f32.mxu0 0.0
      %v619 = vand.u32 %v258, 4294901760
      %620 = vmatmul.mubr.f32.gmra.mrb[0].mxu0 %v619
      %v621 = vpop.f32.mrb[0].mxu0
      %v622 = vadd.f32 %v420, %v621
      %v623 = vpop.f32.mrb[0].mxu0
      %624 = vmatprep.mubr.f32.mxu0 0.0
      %v625 = vand.u32 %v261, 4294901760
      %626 = vmatmul.mubr.f32.gmra.mrb[0].mxu0 %v625
      %v627 = vpop.f32.mrb[0].mxu0
      %v628 = vadd.f32 %v430, %v627
      %v629 = vpop.f32.mrb[0].mxu0
      %630 = vmatprep.mubr.f32.mxu0 0.0
      %v631 = vand.u32 %v264, 4294901760
      %632 = vmatmul.mubr.f32.gmra.mrb[0].mxu0 %v631
      %v633 = vpop.f32.mrb[0].mxu0
      %v634 = vadd.f32 %v440, %v633
      %v635 = vpop.f32.mrb[0].mxu0
      %636 = vmatprep.mubr.f32.mxu0 0.0
      %v637 = vand.u32 %v267, 4294901760
      %638 = vmatmul.mubr.f32.gmra.mrb[0].mxu0 %v637
      %v639 = vpop.f32.mrb[0].mxu0
      %v640 = vadd.f32 %v450, %v639
      %v641 = vpop.f32.mrb[0].mxu0
      %642 = vmatprep.mubr.f32.mxu0 0.0
      %v643 = vand.u32 %v270, 4294901760
      %644 = vmatmul.mubr.f32.gmra.mrb[0].mxu0 %v643
      %v645 = vpop.f32.mrb[0].mxu0
      %v646 = vadd.f32 %v460, %v645
      %v647 = vpop.f32.mrb[0].mxu0
      %648 = vmatprep.mubr.f32.mxu0 0.0
      %v649 = vand.u32 %v273, 4294901760
      %650 = vmatmul.mubr.f32.gmra.mrb[0].mxu0 %v649
      %v651 = vpop.f32.mrb[0].mxu0
      %v652 = vadd.f32 %v470, %v651
      %v653 = vpop.f32.mrb[0].mxu0
      %654 = vmatprep.mubr.f32.mxu0 0.0
      %v655 = vand.u32 %v276, 4294901760
      %656 = vmatmul.mubr.f32.gmra.mrb[0].mxu0 %v655
      %v657 = vpop.f32.mrb[0].mxu0
      %v658 = vadd.f32 %v480, %v657
      %v659 = vpop.f32.mrb[0].mxu0
      %660 = vmatprep.mubr.f32.mxu0 0.0
      %v661 = vand.u32 %v279, 4294901760
      %662 = vmatmul.mubr.f32.gmra.mrb[0].mxu0 %v661
      %v663 = vpop.f32.mrb[0].mxu0
      %v664 = vadd.f32 %v490, %v663
      %v665 = vpop.f32.mrb[0].mxu0
      %666 = vmatprep.mubr.f32.mxu0 0.0
      %v667 = vand.u32 %v282, 4294901760
      %668 = vmatmul.mubr.f32.gmra.mrb[0].mxu0 %v667
      %v669 = vpop.f32.mrb[0].mxu0
      %v670 = vadd.f32 %v500, %v669
      %v671 = vpop.f32.mrb[0].mxu0
      %672 = vmatprep.mubr.f32.mxu0 0.0
      %v673 = vand.u32 %v285, 4294901760
      %674 = vmatmul.mubr.f32.gmra.mrb[0].mxu0 %v673
      %v675 = vpop.f32.mrb[0].mxu0
      %v676 = vadd.f32 %v510, %v675
      %v677 = vpop.f32.mrb[0].mxu0
      %678 = vdwg.mxu0
      %679 = vmatprep.subr.mxu0 0.0
      %v680 = vand.u32 %v237, 4294901760
      %v681 = vsub.f32 %v237, %v680
      %682 = vmatpush1.msra.mxu0 %v681
      %683 = vmatprep.subr.mxu0 0.0
      %684 = vmatpush1.msra.mxu0 0.0
      %685 = vmatprep.subr.mxu0 0.0
      %686 = vmatpush1.msra.mxu0 0.0
      %687 = vmatprep.subr.mxu0 0.0
      %688 = vmatpush1.msra.mxu0 0.0
      %689 = vmatprep.subr.mxu0 0.0
      %690 = vmatpush1.msra.mxu0 0.0
      %691 = vmatprep.subr.mxu0 0.0
      %692 = vmatpush1.msra.mxu0 0.0
      %693 = vmatprep.subr.mxu0 0.0
      %694 = vmatpush1.msra.mxu0 0.0
      %695 = vmatprep.subr.mxu0 0.0
      %696 = vmatpush1.msra.mxu0 0.0
      %697 = vmatprep.subr.mxu0 0.0
      %698 = vmatpush1.msra.mxu0 0.0
      %699 = vmatprep.subr.mxu0 0.0
      %700 = vmatpush1.msra.mxu0 0.0
      %701 = vmatprep.subr.mxu0 0.0
      %702 = vmatpush1.msra.mxu0 0.0
      %703 = vmatprep.subr.mxu0 0.0
      %704 = vmatpush1.msra.mxu0 0.0
      %705 = vmatprep.subr.mxu0 0.0
      %706 = vmatpush1.msra.mxu0 0.0
      %707 = vmatprep.subr.mxu0 0.0
      %708 = vmatpush1.msra.mxu0 0.0
      %709 = vmatprep.subr.mxu0 0.0
      %710 = vmatpush1.msra.mxu0 0.0
      %711 = vmatprep.subr.mxu0 0.0
      %712 = vmatpush1.msra.mxu0 0.0
      %713 = vmatprep.subr.mxu0 0.0
      %714 = vmatpush1.msra.mxu0 0.0
      %715 = vmatprep.subr.mxu0 0.0
      %716 = vmatpush1.msra.mxu0 0.0
      %717 = vmatprep.subr.mxu0 0.0
      %718 = vmatpush1.msra.mxu0 0.0
      %719 = vmatprep.subr.mxu0 0.0
      %720 = vmatpush1.msra.mxu0 0.0
      %721 = vmatprep.subr.mxu0 0.0
      %722 = vmatpush1.msra.mxu0 0.0
      %723 = vmatprep.subr.mxu0 0.0
      %724 = vmatpush1.msra.mxu0 0.0
      %725 = vmatprep.subr.mxu0 0.0
      %726 = vmatpush1.msra.mxu0 0.0
      %727 = vmatprep.subr.mxu0 0.0
      %728 = vmatpush1.msra.mxu0 0.0
      %729 = vmatprep.subr.mxu0 0.0
      %730 = vmatpush1.msra.mxu0 0.0
      %731 = vmatprep.subr.mxu0 0.0
      %732 = vmatpush1.msra.mxu0 0.0
      %733 = vmatprep.subr.mxu0 0.0
      %734 = vmatpush1.msra.mxu0 0.0
      %735 = vmatprep.subr.mxu0 0.0
      %736 = vmatpush1.msra.mxu0 0.0
      %737 = vmatprep.subr.mxu0 0.0
      %738 = vmatpush1.msra.mxu0 0.0
      %739 = vmatprep.subr.mxu0 0.0
      %740 = vmatpush1.msra.mxu0 0.0
      %741 = vmatprep.subr.mxu0 0.0
      %742 = vmatpush1.msra.mxu0 0.0
      %743 = vmatprep.subr.mxu0 0.0
      %744 = vmatpush1.msra.mxu0 0.0
      %745 = vmatprep.mubr.f32.mxu0 0.0
      %v746 = vand.u32 %v240, 4294901760
      %v747 = vsub.f32 %v240, %v746
      %748 = vmatmul.mubr.f32.gmra.mrb[0].mxu0 %v747
      %v749 = vpop.f32.mrb[0].mxu0
      %v750 = vadd.f32 %v586, %v749
      %v751 = vpop.f32.mrb[0].mxu0
      %752 = vmatprep.mubr.f32.mxu0 0.0
      %v753 = vand.u32 %v243, 4294901760
      %v754 = vsub.f32 %v243, %v753
      %755 = vmatmul.mubr.f32.gmra.mrb[0].mxu0 %v754
      %v756 = vpop.f32.mrb[0].mxu0
      %v757 = vadd.f32 %v592, %v756
      %v758 = vpop.f32.mrb[0].mxu0
      %759 = vmatprep.mubr.f32.mxu0 0.0
      %v760 = vand.u32 %v246, 4294901760
      %v761 = vsub.f32 %v246, %v760
      %762 = vmatmul.mubr.f32.gmra.mrb[0].mxu0 %v761
      %v763 = vpop.f32.mrb[0].mxu0
      %v764 = vadd.f32 %v598, %v763
      %v765 = vpop.f32.mrb[0].mxu0
      %766 = vmatprep.mubr.f32.mxu0 0.0
      %v767 = vand.u32 %v249, 4294901760
      %v768 = vsub.f32 %v249, %v767
      %769 = vmatmul.mubr.f32.gmra.mrb[0].mxu0 %v768
      %v770 = vpop.f32.mrb[0].mxu0
      %v771 = vadd.f32 %v604, %v770
      %v772 = vpop.f32.mrb[0].mxu0
      %773 = vmatprep.mubr.f32.mxu0 0.0
      %v774 = vand.u32 %v252, 4294901760
      %v775 = vsub.f32 %v252, %v774
      %776 = vmatmul.mubr.f32.gmra.mrb[0].mxu0 %v775
      %v777 = vpop.f32.mrb[0].mxu0
      %v778 = vadd.f32 %v610, %v777
      %v779 = vpop.f32.mrb[0].mxu0
      %780 = vmatprep.mubr.f32.mxu0 0.0
      %v781 = vand.u32 %v255, 4294901760
      %v782 = vsub.f32 %v255, %v781
      %783 = vmatmul.mubr.f32.gmra.mrb[0].mxu0 %v782
      %v784 = vpop.f32.mrb[0].mxu0
      %v785 = vadd.f32 %v616, %v784
      %v786 = vpop.f32.mrb[0].mxu0
      %787 = vmatprep.mubr.f32.mxu0 0.0
      %v788 = vand.u32 %v258, 4294901760
      %v789 = vsub.f32 %v258, %v788
      %790 = vmatmul.mubr.f32.gmra.mrb[0].mxu0 %v789
      %v791 = vpop.f32.mrb[0].mxu0
      %v792 = vadd.f32 %v622, %v791
      %v793 = vpop.f32.mrb[0].mxu0
      %794 = vmatprep.mubr.f32.mxu0 0.0
      %v795 = vand.u32 %v261, 4294901760
      %v796 = vsub.f32 %v261, %v795
      %797 = vmatmul.mubr.f32.gmra.mrb[0].mxu0 %v796
      %v798 = vpop.f32.mrb[0].mxu0
      %v799 = vadd.f32 %v628, %v798
      %v800 = vpop.f32.mrb[0].mxu0
      %801 = vmatprep.mubr.f32.mxu0 0.0
      %v802 = vand.u32 %v264, 4294901760
      %v803 = vsub.f32 %v264, %v802
      %804 = vmatmul.mubr.f32.gmra.mrb[0].mxu0 %v803
      %v805 = vpop.f32.mrb[0].mxu0
      %v806 = vadd.f32 %v634, %v805
      %v807 = vpop.f32.mrb[0].mxu0
      %808 = vmatprep.mubr.f32.mxu0 0.0
      %v809 = vand.u32 %v267, 4294901760
      %v810 = vsub.f32 %v267, %v809
      %811 = vmatmul.mubr.f32.gmra.mrb[0].mxu0 %v810
      %v812 = vpop.f32.mrb[0].mxu0
      %v813 = vadd.f32 %v640, %v812
      %v814 = vpop.f32.mrb[0].mxu0
      %815 = vmatprep.mubr.f32.mxu0 0.0
      %v816 = vand.u32 %v270, 4294901760
      %v817 = vsub.f32 %v270, %v816
      %818 = vmatmul.mubr.f32.gmra.mrb[0].mxu0 %v817
      %v819 = vpop.f32.mrb[0].mxu0
      %v820 = vadd.f32 %v646, %v819
      %v821 = vpop.f32.mrb[0].mxu0
      %822 = vmatprep.mubr.f32.mxu0 0.0
      %v823 = vand.u32 %v273, 4294901760
      %v824 = vsub.f32 %v273, %v823
      %825 = vmatmul.mubr.f32.gmra.mrb[0].mxu0 %v824
      %v826 = vpop.f32.mrb[0].mxu0
      %v827 = vadd.f32 %v652, %v826
      %v828 = vpop.f32.mrb[0].mxu0
      %829 = vmatprep.mubr.f32.mxu0 0.0
      %v830 = vand.u32 %v276, 4294901760
      %v831 = vsub.f32 %v276, %v830
      %832 = vmatmul.mubr.f32.gmra.mrb[0].mxu0 %v831
      %v833 = vpop.f32.mrb[0].mxu0
      %v834 = vadd.f32 %v658, %v833
      %v835 = vpop.f32.mrb[0].mxu0
      %836 = vmatprep.mubr.f32.mxu0 0.0
      %v837 = vand.u32 %v279, 4294901760
      %v838 = vsub.f32 %v279, %v837
      %839 = vmatmul.mubr.f32.gmra.mrb[0].mxu0 %v838
      %v840 = vpop.f32.mrb[0].mxu0
      %v841 = vadd.f32 %v664, %v840
      %v842 = vpop.f32.mrb[0].mxu0
      %843 = vmatprep.mubr.f32.mxu0 0.0
      %v844 = vand.u32 %v282, 4294901760
      %v845 = vsub.f32 %v282, %v844
      %846 = vmatmul.mubr.f32.gmra.mrb[0].mxu0 %v845
      %v847 = vpop.f32.mrb[0].mxu0
      %v848 = vadd.f32 %v670, %v847
      %v849 = vpop.f32.mrb[0].mxu0
      %850 = vmatprep.mubr.f32.mxu0 0.0
      %v851 = vand.u32 %v285, 4294901760
      %v852 = vsub.f32 %v285, %v851
      %853 = vmatmul.mubr.f32.gmra.mrb[0].mxu0 %v852
      %v854 = vpop.f32.mrb[0].mxu0
      %v855 = vadd.f32 %v676, %v854
      %v856 = vpop.f32.mrb[0].mxu0
      %857 = vdwg.mxu0
      %858 = vmatprep.subr.mxu0 0.0
      %v859 = vand.u32 %v237, 4294901760
      %860 = vmatpush1.msra.mxu0 %v859
      %861 = vmatprep.subr.mxu0 0.0
      %862 = vmatpush1.msra.mxu0 0.0
      %863 = vmatprep.subr.mxu0 0.0
      %864 = vmatpush1.msra.mxu0 0.0
      %865 = vmatprep.subr.mxu0 0.0
      %866 = vmatpush1.msra.mxu0 0.0
      %867 = vmatprep.subr.mxu0 0.0
      %868 = vmatpush1.msra.mxu0 0.0
      %869 = vmatprep.subr.mxu0 0.0
      %870 = vmatpush1.msra.mxu0 0.0
      %871 = vmatprep.subr.mxu0 0.0
      %872 = vmatpush1.msra.mxu0 0.0
      %873 = vmatprep.subr.mxu0 0.0
      %874 = vmatpush1.msra.mxu0 0.0
      %875 = vmatprep.subr.mxu0 0.0
      %876 = vmatpush1.msra.mxu0 0.0
      %877 = vmatprep.subr.mxu0 0.0
      %878 = vmatpush1.msra.mxu0 0.0
      %879 = vmatprep.subr.mxu0 0.0
      %880 = vmatpush1.msra.mxu0 0.0
      %881 = vmatprep.subr.mxu0 0.0
      %882 = vmatpush1.msra.mxu0 0.0
      %883 = vmatprep.subr.mxu0 0.0
      %884 = vmatpush1.msra.mxu0 0.0
      %885 = vmatprep.subr.mxu0 0.0
      %886 = vmatpush1.msra.mxu0 0.0
      %887 = vmatprep.subr.mxu0 0.0
      %888 = vmatpush1.msra.mxu0 0.0
      %889 = vmatprep.subr.mxu0 0.0
      %890 = vmatpush1.msra.mxu0 0.0
      %891 = vmatprep.subr.mxu0 0.0
      %892 = vmatpush1.msra.mxu0 0.0
      %893 = vmatprep.subr.mxu0 0.0
      %894 = vmatpush1.msra.mxu0 0.0
      %895 = vmatprep.subr.mxu0 0.0
      %896 = vmatpush1.msra.mxu0 0.0
      %897 = vmatprep.subr.mxu0 0.0
      %898 = vmatpush1.msra.mxu0 0.0
      %899 = vmatprep.subr.mxu0 0.0
      %900 = vmatpush1.msra.mxu0 0.0
      %901 = vmatprep.subr.mxu0 0.0
      %902 = vmatpush1.msra.mxu0 0.0
      %903 = vmatprep.subr.mxu0 0.0
      %904 = vmatpush1.msra.mxu0 0.0
      %905 = vmatprep.subr.mxu0 0.0
      %906 = vmatpush1.msra.mxu0 0.0
      %907 = vmatprep.subr.mxu0 0.0
      %908 = vmatpush1.msra.mxu0 0.0
      %909 = vmatprep.subr.mxu0 0.0
      %910 = vmatpush1.msra.mxu0 0.0
      %911 = vmatprep.subr.mxu0 0.0
      %912 = vmatpush1.msra.mxu0 0.0
      %913 = vmatprep.subr.mxu0 0.0
      %914 = vmatpush1.msra.mxu0 0.0
      %915 = vmatprep.subr.mxu0 0.0
      %916 = vmatpush1.msra.mxu0 0.0
      %917 = vmatprep.subr.mxu0 0.0
      %918 = vmatpush1.msra.mxu0 0.0
      %919 = vmatprep.subr.mxu0 0.0
      %920 = vmatpush1.msra.mxu0 0.0
      %921 = vmatprep.subr.mxu0 0.0
      %922 = vmatpush1.msra.mxu0 0.0
      %923 = vmatprep.mubr.f32.mxu0 0.0
      %v924 = vand.u32 %v240, 4294901760
      %v925 = vsub.f32 %v240, %v924
      %v926 = vand.u32 %v925, 4294901760
      %927 = vmatmul.mubr.f32.gmra.mrb[0].mxu0 %v926
      %v928 = vpop.f32.mrb[0].mxu0
      %v929 = vadd.f32 %v750, %v928
      %v930 = vpop.f32.mrb[0].mxu0
      %931 = vmatprep.mubr.f32.mxu0 0.0
      %v932 = vand.u32 %v243, 4294901760
      %v933 = vsub.f32 %v243, %v932
      %v934 = vand.u32 %v933, 4294901760
      %935 = vmatmul.mubr.f32.gmra.mrb[0].mxu0 %v934
      %v936 = vpop.f32.mrb[0].mxu0
      %v937 = vadd.f32 %v757, %v936
      %v938 = vpop.f32.mrb[0].mxu0
      %939 = vmatprep.mubr.f32.mxu0 0.0
      %v940 = vand.u32 %v246, 4294901760
      %v941 = vsub.f32 %v246, %v940
      %v942 = vand.u32 %v941, 4294901760
      %943 = vmatmul.mubr.f32.gmra.mrb[0].mxu0 %v942
      %v944 = vpop.f32.mrb[0].mxu0
      %v945 = vadd.f32 %v764, %v944
      %v946 = vpop.f32.mrb[0].mxu0
      %947 = vmatprep.mubr.f32.mxu0 0.0
      %v948 = vand.u32 %v249, 4294901760
      %v949 = vsub.f32 %v249, %v948
      %v950 = vand.u32 %v949, 4294901760
      %951 = vmatmul.mubr.f32.gmra.mrb[0].mxu0 %v950
      %v952 = vpop.f32.mrb[0].mxu0
      %v953 = vadd.f32 %v771, %v952
      %v954 = vpop.f32.mrb[0].mxu0
      %955 = vmatprep.mubr.f32.mxu0 0.0
      %v956 = vand.u32 %v252, 4294901760
      %v957 = vsub.f32 %v252, %v956
      %v958 = vand.u32 %v957, 4294901760
      %959 = vmatmul.mubr.f32.gmra.mrb[0].mxu0 %v958
      %v960 = vpop.f32.mrb[0].mxu0
      %v961 = vadd.f32 %v778, %v960
      %v962 = vpop.f32.mrb[0].mxu0
      %963 = vmatprep.mubr.f32.mxu0 0.0
      %v964 = vand.u32 %v255, 4294901760
      %v965 = vsub.f32 %v255, %v964
      %v966 = vand.u32 %v965, 4294901760
      %967 = vmatmul.mubr.f32.gmra.mrb[0].mxu0 %v966
      %v968 = vpop.f32.mrb[0].mxu0
      %v969 = vadd.f32 %v785, %v968
      %v970 = vpop.f32.mrb[0].mxu0
      %971 = vmatprep.mubr.f32.mxu0 0.0
      %v972 = vand.u32 %v258, 4294901760
      %v973 = vsub.f32 %v258, %v972
      %v974 = vand.u32 %v973, 4294901760
      %975 = vmatmul.mubr.f32.gmra.mrb[0].mxu0 %v974
      %v976 = vpop.f32.mrb[0].mxu0
      %v977 = vadd.f32 %v792, %v976
      %v978 = vpop.f32.mrb[0].mxu0
      %979 = vmatprep.mubr.f32.mxu0 0.0
      %v980 = vand.u32 %v261, 4294901760
      %v981 = vsub.f32 %v261, %v980
      %v982 = vand.u32 %v981, 4294901760
      %983 = vmatmul.mubr.f32.gmra.mrb[0].mxu0 %v982
      %v984 = vpop.f32.mrb[0].mxu0
      %v985 = vadd.f32 %v799, %v984
      %v986 = vpop.f32.mrb[0].mxu0
      %987 = vmatprep.mubr.f32.mxu0 0.0
      %v988 = vand.u32 %v264, 4294901760
      %v989 = vsub.f32 %v264, %v988
      %v990 = vand.u32 %v989, 4294901760
      %991 = vmatmul.mubr.f32.gmra.mrb[0].mxu0 %v990
      %v992 = vpop.f32.mrb[0].mxu0
      %v993 = vadd.f32 %v806, %v992
      %v994 = vpop.f32.mrb[0].mxu0
      %995 = vmatprep.mubr.f32.mxu0 0.0
      %v996 = vand.u32 %v267, 4294901760
      %v997 = vsub.f32 %v267, %v996
      %v998 = vand.u32 %v997, 4294901760
      %999 = vmatmul.mubr.f32.gmra.mrb[0].mxu0 %v998
      %v1000 = vpop.f32.mrb[0].mxu0
      %v1001 = vadd.f32 %v813, %v1000
      %v1002 = vpop.f32.mrb[0].mxu0
      %1003 = vmatprep.mubr.f32.mxu0 0.0
      %v1004 = vand.u32 %v270, 4294901760
      %v1005 = vsub.f32 %v270, %v1004
      %v1006 = vand.u32 %v1005, 4294901760
      %1007 = vmatmul.mubr.f32.gmra.mrb[0].mxu0 %v1006
      %v1008 = vpop.f32.mrb[0].mxu0
      %v1009 = vadd.f32 %v820, %v1008
      %v1010 = vpop.f32.mrb[0].mxu0
      %1011 = vmatprep.mubr.f32.mxu0 0.0
      %v1012 = vand.u32 %v273, 4294901760
      %v1013 = vsub.f32 %v273, %v1012
      %v1014 = vand.u32 %v1013, 4294901760
      %1015 = vmatmul.mubr.f32.gmra.mrb[0].mxu0 %v1014
      %v1016 = vpop.f32.mrb[0].mxu0
      %v1017 = vadd.f32 %v827, %v1016
      %v1018 = vpop.f32.mrb[0].mxu0
      %1019 = vmatprep.mubr.f32.mxu0 0.0
      %v1020 = vand.u32 %v276, 4294901760
      %v1021 = vsub.f32 %v276, %v1020
      %v1022 = vand.u32 %v1021, 4294901760
      %1023 = vmatmul.mubr.f32.gmra.mrb[0].mxu0 %v1022
      %v1024 = vpop.f32.mrb[0].mxu0
      %v1025 = vadd.f32 %v834, %v1024
      %v1026 = vpop.f32.mrb[0].mxu0
      %1027 = vmatprep.mubr.f32.mxu0 0.0
      %v1028 = vand.u32 %v279, 4294901760
      %v1029 = vsub.f32 %v279, %v1028
      %v1030 = vand.u32 %v1029, 4294901760
      %1031 = vmatmul.mubr.f32.gmra.mrb[0].mxu0 %v1030
      %v1032 = vpop.f32.mrb[0].mxu0
      %v1033 = vadd.f32 %v841, %v1032
      %v1034 = vpop.f32.mrb[0].mxu0
      %1035 = vmatprep.mubr.f32.mxu0 0.0
      %v1036 = vand.u32 %v282, 4294901760
      %v1037 = vsub.f32 %v282, %v1036
      %v1038 = vand.u32 %v1037, 4294901760
      %1039 = vmatmul.mubr.f32.gmra.mrb[0].mxu0 %v1038
      %v1040 = vpop.f32.mrb[0].mxu0
      %v1041 = vadd.f32 %v848, %v1040
      %v1042 = vpop.f32.mrb[0].mxu0
      %1043 = vmatprep.mubr.f32.mxu0 0.0
      %v1044 = vand.u32 %v285, 4294901760
      %v1045 = vsub.f32 %v285, %v1044
      %v1046 = vand.u32 %v1045, 4294901760
      %1047 = vmatmul.mubr.f32.gmra.mrb[0].mxu0 %v1046
      %v1048 = vpop.f32.mrb[0].mxu0
      %v1049 = vadd.f32 %v855, %v1048
      %v1050 = vpop.f32.mrb[0].mxu0
      %1051 = vdwg.mxu0
      %1052 = vmatprep.subr.mxu0 0.0
      %v1053 = vand.u32 %v237, 4294901760
      %v1054 = vsub.f32 %v237, %v1053
      %v1055 = vand.u32 %v1054, 4294901760
      %1056 = vmatpush1.msra.mxu0 %v1055
      %1057 = vmatprep.subr.mxu0 0.0
      %1058 = vmatpush1.msra.mxu0 0.0
      %1059 = vmatprep.subr.mxu0 0.0
      %1060 = vmatpush1.msra.mxu0 0.0
      %1061 = vmatprep.subr.mxu0 0.0
      %1062 = vmatpush1.msra.mxu0 0.0
      %1063 = vmatprep.subr.mxu0 0.0
      %1064 = vmatpush1.msra.mxu0 0.0
      %1065 = vmatprep.subr.mxu0 0.0
      %1066 = vmatpush1.msra.mxu0 0.0
      %1067 = vmatprep.subr.mxu0 0.0
      %1068 = vmatpush1.msra.mxu0 0.0
      %1069 = vmatprep.subr.mxu0 0.0
      %1070 = vmatpush1.msra.mxu0 0.0
      %1071 = vmatprep.subr.mxu0 0.0
      %1072 = vmatpush1.msra.mxu0 0.0
      %1073 = vmatprep.subr.mxu0 0.0
      %1074 = vmatpush1.msra.mxu0 0.0
      %1075 = vmatprep.subr.mxu0 0.0
      %1076 = vmatpush1.msra.mxu0 0.0
      %1077 = vmatprep.subr.mxu0 0.0
      %1078 = vmatpush1.msra.mxu0 0.0
      %1079 = vmatprep.subr.mxu0 0.0
      %1080 = vmatpush1.msra.mxu0 0.0
      %1081 = vmatprep.subr.mxu0 0.0
      %1082 = vmatpush1.msra.mxu0 0.0
      %1083 = vmatprep.subr.mxu0 0.0
      %1084 = vmatpush1.msra.mxu0 0.0
      %1085 = vmatprep.subr.mxu0 0.0
      %1086 = vmatpush1.msra.mxu0 0.0
      %1087 = vmatprep.subr.mxu0 0.0
      %1088 = vmatpush1.msra.mxu0 0.0
      %1089 = vmatprep.subr.mxu0 0.0
      %1090 = vmatpush1.msra.mxu0 0.0
      %1091 = vmatprep.subr.mxu0 0.0
      %1092 = vmatpush1.msra.mxu0 0.0
      %1093 = vmatprep.subr.mxu0 0.0
      %1094 = vmatpush1.msra.mxu0 0.0
      %1095 = vmatprep.subr.mxu0 0.0
      %1096 = vmatpush1.msra.mxu0 0.0
      %1097 = vmatprep.subr.mxu0 0.0
      %1098 = vmatpush1.msra.mxu0 0.0
      %1099 = vmatprep.subr.mxu0 0.0
      %1100 = vmatpush1.msra.mxu0 0.0
      %1101 = vmatprep.subr.mxu0 0.0
      %1102 = vmatpush1.msra.mxu0 0.0
      %1103 = vmatprep.subr.mxu0 0.0
      %1104 = vmatpush1.msra.mxu0 0.0
      %1105 = vmatprep.subr.mxu0 0.0
      %1106 = vmatpush1.msra.mxu0 0.0
      %1107 = vmatprep.subr.mxu0 0.0
      %1108 = vmatpush1.msra.mxu0 0.0
      %1109 = vmatprep.subr.mxu0 0.0
      %1110 = vmatpush1.msra.mxu0 0.0
      %1111 = vmatprep.subr.mxu0 0.0
      %1112 = vmatpush1.msra.mxu0 0.0
      %1113 = vmatprep.subr.mxu0 0.0
      %1114 = vmatpush1.msra.mxu0 0.0
      %1115 = vmatprep.subr.mxu0 0.0
      %1116 = vmatpush1.msra.mxu0 0.0
      %1117 = vmatprep.subr.mxu0 0.0
      %1118 = vmatpush1.msra.mxu0 0.0
      %1119 = vmatprep.mubr.f32.mxu0 0.0
      %v1120 = vand.u32 %v240, 4294901760
      %1121 = vmatmul.mubr.f32.gmra.mrb[0].mxu0 %v1120
      %v1122 = vpop.f32.mrb[0].mxu0
      %v1123 = vadd.f32 %v929, %v1122
      %v1124 = vpop.f32.mrb[0].mxu0
      %1125 = vmatprep.mubr.f32.mxu0 0.0
      %v1126 = vand.u32 %v243, 4294901760
      %1127 = vmatmul.mubr.f32.gmra.mrb[0].mxu0 %v1126
      %v1128 = vpop.f32.mrb[0].mxu0
      %v1129 = vadd.f32 %v937, %v1128
      %v1130 = vpop.f32.mrb[0].mxu0
      %1131 = vmatprep.mubr.f32.mxu0 0.0
      %v1132 = vand.u32 %v246, 4294901760
      %1133 = vmatmul.mubr.f32.gmra.mrb[0].mxu0 %v1132
      %v1134 = vpop.f32.mrb[0].mxu0
      %v1135 = vadd.f32 %v945, %v1134
      %v1136 = vpop.f32.mrb[0].mxu0
      %1137 = vmatprep.mubr.f32.mxu0 0.0
      %v1138 = vand.u32 %v249, 4294901760
      %1139 = vmatmul.mubr.f32.gmra.mrb[0].mxu0 %v1138
      %v1140 = vpop.f32.mrb[0].mxu0
      %v1141 = vadd.f32 %v953, %v1140
      %v1142 = vpop.f32.mrb[0].mxu0
      %1143 = vmatprep.mubr.f32.mxu0 0.0
      %v1144 = vand.u32 %v252, 4294901760
      %1145 = vmatmul.mubr.f32.gmra.mrb[0].mxu0 %v1144
      %v1146 = vpop.f32.mrb[0].mxu0
      %v1147 = vadd.f32 %v961, %v1146
      %v1148 = vpop.f32.mrb[0].mxu0
      %1149 = vmatprep.mubr.f32.mxu0 0.0
      %v1150 = vand.u32 %v255, 4294901760
      %1151 = vmatmul.mubr.f32.gmra.mrb[0].mxu0 %v1150
      %v1152 = vpop.f32.mrb[0].mxu0
      %v1153 = vadd.f32 %v969, %v1152
      %v1154 = vpop.f32.mrb[0].mxu0
      %1155 = vmatprep.mubr.f32.mxu0 0.0
      %v1156 = vand.u32 %v258, 4294901760
      %1157 = vmatmul.mubr.f32.gmra.mrb[0].mxu0 %v1156
      %v1158 = vpop.f32.mrb[0].mxu0
      %v1159 = vadd.f32 %v977, %v1158
      %v1160 = vpop.f32.mrb[0].mxu0
      %1161 = vmatprep.mubr.f32.mxu0 0.0
      %v1162 = vand.u32 %v261, 4294901760
      %1163 = vmatmul.mubr.f32.gmra.mrb[0].mxu0 %v1162
      %v1164 = vpop.f32.mrb[0].mxu0
      %v1165 = vadd.f32 %v985, %v1164
      %v1166 = vpop.f32.mrb[0].mxu0
      %1167 = vmatprep.mubr.f32.mxu0 0.0
      %v1168 = vand.u32 %v264, 4294901760
      %1169 = vmatmul.mubr.f32.gmra.mrb[0].mxu0 %v1168
      %v1170 = vpop.f32.mrb[0].mxu0
      %v1171 = vadd.f32 %v993, %v1170
      %v1172 = vpop.f32.mrb[0].mxu0
      %1173 = vmatprep.mubr.f32.mxu0 0.0
      %v1174 = vand.u32 %v267, 4294901760
      %1175 = vmatmul.mubr.f32.gmra.mrb[0].mxu0 %v1174
      %v1176 = vpop.f32.mrb[0].mxu0
      %v1177 = vadd.f32 %v1001, %v1176
      %v1178 = vpop.f32.mrb[0].mxu0
      %1179 = vmatprep.mubr.f32.mxu0 0.0
      %v1180 = vand.u32 %v270, 4294901760
      %1181 = vmatmul.mubr.f32.gmra.mrb[0].mxu0 %v1180
      %v1182 = vpop.f32.mrb[0].mxu0
      %v1183 = vadd.f32 %v1009, %v1182
      %v1184 = vpop.f32.mrb[0].mxu0
      %1185 = vmatprep.mubr.f32.mxu0 0.0
      %v1186 = vand.u32 %v273, 4294901760
      %1187 = vmatmul.mubr.f32.gmra.mrb[0].mxu0 %v1186
      %v1188 = vpop.f32.mrb[0].mxu0
      %v1189 = vadd.f32 %v1017, %v1188
      %v1190 = vpop.f32.mrb[0].mxu0
      %1191 = vmatprep.mubr.f32.mxu0 0.0
      %v1192 = vand.u32 %v276, 4294901760
      %1193 = vmatmul.mubr.f32.gmra.mrb[0].mxu0 %v1192
      %v1194 = vpop.f32.mrb[0].mxu0
      %v1195 = vadd.f32 %v1025, %v1194
      %v1196 = vpop.f32.mrb[0].mxu0
      %1197 = vmatprep.mubr.f32.mxu0 0.0
      %v1198 = vand.u32 %v279, 4294901760
      %1199 = vmatmul.mubr.f32.gmra.mrb[0].mxu0 %v1198
      %v1200 = vpop.f32.mrb[0].mxu0
      %v1201 = vadd.f32 %v1033, %v1200
      %v1202 = vpop.f32.mrb[0].mxu0
      %1203 = vmatprep.mubr.f32.mxu0 0.0
      %v1204 = vand.u32 %v282, 4294901760
      %1205 = vmatmul.mubr.f32.gmra.mrb[0].mxu0 %v1204
      %v1206 = vpop.f32.mrb[0].mxu0
      %v1207 = vadd.f32 %v1041, %v1206
      %v1208 = vpop.f32.mrb[0].mxu0
      %1209 = vmatprep.mubr.f32.mxu0 0.0
      %v1210 = vand.u32 %v285, 4294901760
      %1211 = vmatmul.mubr.f32.gmra.mrb[0].mxu0 %v1210
      %v1212 = vpop.f32.mrb[0].mxu0
      %v1213 = vadd.f32 %v1049, %v1212
      %v1214 = vpop.f32.mrb[0].mxu0
      %1215 = vdwg.mxu0
      %1216 = vmatprep.subr.mxu0 0.0
      %v1217 = vand.u32 %v237, 4294901760
      %1218 = vmatpush1.msra.mxu0 %v1217
      %1219 = vmatprep.subr.mxu0 0.0
      %1220 = vmatpush1.msra.mxu0 0.0
      %1221 = vmatprep.subr.mxu0 0.0
      %1222 = vmatpush1.msra.mxu0 0.0
      %1223 = vmatprep.subr.mxu0 0.0
      %1224 = vmatpush1.msra.mxu0 0.0
      %1225 = vmatprep.subr.mxu0 0.0
      %1226 = vmatpush1.msra.mxu0 0.0
      %1227 = vmatprep.subr.mxu0 0.0
      %1228 = vmatpush1.msra.mxu0 0.0
      %1229 = vmatprep.subr.mxu0 0.0
      %1230 = vmatpush1.msra.mxu0 0.0
      %1231 = vmatprep.subr.mxu0 0.0
      %1232 = vmatpush1.msra.mxu0 0.0
      %1233 = vmatprep.subr.mxu0 0.0
      %1234 = vmatpush1.msra.mxu0 0.0
      %1235 = vmatprep.subr.mxu0 0.0
      %1236 = vmatpush1.msra.mxu0 0.0
      %1237 = vmatprep.subr.mxu0 0.0
      %1238 = vmatpush1.msra.mxu0 0.0
      %1239 = vmatprep.subr.mxu0 0.0
      %1240 = vmatpush1.msra.mxu0 0.0
      %1241 = vmatprep.subr.mxu0 0.0
      %1242 = vmatpush1.msra.mxu0 0.0
      %1243 = vmatprep.subr.mxu0 0.0
      %1244 = vmatpush1.msra.mxu0 0.0
      %1245 = vmatprep.subr.mxu0 0.0
      %1246 = vmatpush1.msra.mxu0 0.0
      %1247 = vmatprep.subr.mxu0 0.0
      %1248 = vmatpush1.msra.mxu0 0.0
      %1249 = vmatprep.subr.mxu0 0.0
      %1250 = vmatpush1.msra.mxu0 0.0
      %1251 = vmatprep.subr.mxu0 0.0
      %1252 = vmatpush1.msra.mxu0 0.0
      %1253 = vmatprep.subr.mxu0 0.0
      %1254 = vmatpush1.msra.mxu0 0.0
      %1255 = vmatprep.subr.mxu0 0.0
      %1256 = vmatpush1.msra.mxu0 0.0
      %1257 = vmatprep.subr.mxu0 0.0
      %1258 = vmatpush1.msra.mxu0 0.0
      %1259 = vmatprep.subr.mxu0 0.0
      %1260 = vmatpush1.msra.mxu0 0.0
      %1261 = vmatprep.subr.mxu0 0.0
      %1262 = vmatpush1.msra.mxu0 0.0
      %1263 = vmatprep.subr.mxu0 0.0
      %1264 = vmatpush1.msra.mxu0 0.0
      %1265 = vmatprep.subr.mxu0 0.0
      %1266 = vmatpush1.msra.mxu0 0.0
      %1267 = vmatprep.subr.mxu0 0.0
      %1268 = vmatpush1.msra.mxu0 0.0
      %1269 = vmatprep.subr.mxu0 0.0
      %1270 = vmatpush1.msra.mxu0 0.0
      %1271 = vmatprep.subr.mxu0 0.0
      %1272 = vmatpush1.msra.mxu0 0.0
      %1273 = vmatprep.subr.mxu0 0.0
      %1274 = vmatpush1.msra.mxu0 0.0
      %1275 = vmatprep.subr.mxu0 0.0
      %1276 = vmatpush1.msra.mxu0 0.0
      %1277 = vmatprep.subr.mxu0 0.0
      %1278 = vmatpush1.msra.mxu0 0.0
      %1279 = vmatprep.subr.mxu0 0.0
      %1280 = vmatpush1.msra.mxu0 0.0
      %1281 = vmatprep.mubr.f32.mxu0 0.0
      %v1282 = vand.u32 %v240, 4294901760
      %1283 = vmatmul.mubr.f32.gmra.mrb[0].mxu0 %v1282
      %v1284 = vpop.f32.mrb[0].mxu0
      %v1285 = vadd.f32 %v1123, %v1284
      %v1286 = vpop.f32.mrb[0].mxu0
      %1287 = vmatprep.mubr.f32.mxu0 0.0
      %v1288 = vand.u32 %v243, 4294901760
      %1289 = vmatmul.mubr.f32.gmra.mrb[0].mxu0 %v1288
      %v1290 = vpop.f32.mrb[0].mxu0
      %v1291 = vadd.f32 %v1129, %v1290
      %v1292 = vpop.f32.mrb[0].mxu0
      %1293 = vmatprep.mubr.f32.mxu0 0.0
      %v1294 = vand.u32 %v246, 4294901760
      %1295 = vmatmul.mubr.f32.gmra.mrb[0].mxu0 %v1294
      %v1296 = vpop.f32.mrb[0].mxu0
      %v1297 = vadd.f32 %v1135, %v1296
      %v1298 = vpop.f32.mrb[0].mxu0
      %1299 = vmatprep.mubr.f32.mxu0 0.0
      %v1300 = vand.u32 %v249, 4294901760
      %1301 = vmatmul.mubr.f32.gmra.mrb[0].mxu0 %v1300
      %v1302 = vpop.f32.mrb[0].mxu0
      %v1303 = vadd.f32 %v1141, %v1302
      %v1304 = vpop.f32.mrb[0].mxu0
      %1305 = vmatprep.mubr.f32.mxu0 0.0
      %v1306 = vand.u32 %v252, 4294901760
      %1307 = vmatmul.mubr.f32.gmra.mrb[0].mxu0 %v1306
      %v1308 = vpop.f32.mrb[0].mxu0
      %v1309 = vadd.f32 %v1147, %v1308
      %v1310 = vpop.f32.mrb[0].mxu0
      %1311 = vmatprep.mubr.f32.mxu0 0.0
      %v1312 = vand.u32 %v255, 4294901760
      %1313 = vmatmul.mubr.f32.gmra.mrb[0].mxu0 %v1312
      %v1314 = vpop.f32.mrb[0].mxu0
      %v1315 = vadd.f32 %v1153, %v1314
      %v1316 = vpop.f32.mrb[0].mxu0
      %1317 = vmatprep.mubr.f32.mxu0 0.0
      %v1318 = vand.u32 %v258, 4294901760
      %1319 = vmatmul.mubr.f32.gmra.mrb[0].mxu0 %v1318
      %v1320 = vpop.f32.mrb[0].mxu0
      %v1321 = vadd.f32 %v1159, %v1320
      %v1322 = vpop.f32.mrb[0].mxu0
      %1323 = vmatprep.mubr.f32.mxu0 0.0
      %v1324 = vand.u32 %v261, 4294901760
      %1325 = vmatmul.mubr.f32.gmra.mrb[0].mxu0 %v1324
      %v1326 = vpop.f32.mrb[0].mxu0
      %v1327 = vadd.f32 %v1165, %v1326
      %v1328 = vpop.f32.mrb[0].mxu0
      %1329 = vmatprep.mubr.f32.mxu0 0.0
      %v1330 = vand.u32 %v264, 4294901760
      %1331 = vmatmul.mubr.f32.gmra.mrb[0].mxu0 %v1330
      %v1332 = vpop.f32.mrb[0].mxu0
      %v1333 = vadd.f32 %v1171, %v1332
      %v1334 = vpop.f32.mrb[0].mxu0
      %1335 = vmatprep.mubr.f32.mxu0 0.0
      %v1336 = vand.u32 %v267, 4294901760
      %1337 = vmatmul.mubr.f32.gmra.mrb[0].mxu0 %v1336
      %v1338 = vpop.f32.mrb[0].mxu0
      %v1339 = vadd.f32 %v1177, %v1338
      %v1340 = vpop.f32.mrb[0].mxu0
      %1341 = vmatprep.mubr.f32.mxu0 0.0
      %v1342 = vand.u32 %v270, 4294901760
      %1343 = vmatmul.mubr.f32.gmra.mrb[0].mxu0 %v1342
      %v1344 = vpop.f32.mrb[0].mxu0
      %v1345 = vadd.f32 %v1183, %v1344
      %v1346 = vpop.f32.mrb[0].mxu0
      %1347 = vmatprep.mubr.f32.mxu0 0.0
      %v1348 = vand.u32 %v273, 4294901760
      %1349 = vmatmul.mubr.f32.gmra.mrb[0].mxu0 %v1348
      %v1350 = vpop.f32.mrb[0].mxu0
      %v1351 = vadd.f32 %v1189, %v1350
      %v1352 = vpop.f32.mrb[0].mxu0
      %1353 = vmatprep.mubr.f32.mxu0 0.0
      %v1354 = vand.u32 %v276, 4294901760
      %1355 = vmatmul.mubr.f32.gmra.mrb[0].mxu0 %v1354
      %v1356 = vpop.f32.mrb[0].mxu0
      %v1357 = vadd.f32 %v1195, %v1356
      %v1358 = vpop.f32.mrb[0].mxu0
      %1359 = vmatprep.mubr.f32.mxu0 0.0
      %v1360 = vand.u32 %v279, 4294901760
      %1361 = vmatmul.mubr.f32.gmra.mrb[0].mxu0 %v1360
      %v1362 = vpop.f32.mrb[0].mxu0
      %v1363 = vadd.f32 %v1201, %v1362
      %v1364 = vpop.f32.mrb[0].mxu0
      %1365 = vmatprep.mubr.f32.mxu0 0.0
      %v1366 = vand.u32 %v282, 4294901760
      %1367 = vmatmul.mubr.f32.gmra.mrb[0].mxu0 %v1366
      %v1368 = vpop.f32.mrb[0].mxu0
      %v1369 = vadd.f32 %v1207, %v1368
      %v1370 = vpop.f32.mrb[0].mxu0
      %1371 = vmatprep.mubr.f32.mxu0 0.0
      %v1372 = vand.u32 %v285, 4294901760
      %1373 = vmatmul.mubr.f32.gmra.mrb[0].mxu0 %v1372
      %v1374 = vpop.f32.mrb[0].mxu0
      %v1375 = vadd.f32 %v1213, %v1374
      %v1376 = vpop.f32.mrb[0].mxu0
      %1377 = vdwg.mxu0
      %v1378 = vmax.f32 %v1285, 0.0
      %v1379 = vmax.f32 %v1291, 0.0
      %v1380 = vmax.f32 %v1297, 0.0
      %v1381 = vmax.f32 %v1303, 0.0
      %v1382 = vmax.f32 %v1309, 0.0
      %v1383 = vmax.f32 %v1315, 0.0
      %v1384 = vmax.f32 %v1321, 0.0
      %v1385 = vmax.f32 %v1327, 0.0
      %v1386 = vmax.f32 %v1333, 0.0
      %v1387 = vmax.f32 %v1339, 0.0
      %v1388 = vmax.f32 %v1345, 0.0
      %v1389 = vmax.f32 %v1351, 0.0
      %v1390 = vmax.f32 %v1357, 0.0
      %v1391 = vmax.f32 %v1363, 0.0
      %v1392 = vmax.f32 %v1369, 0.0
      %v1393 = vmax.f32 %v1375, 0.0
      %v1394 = vrsqrt.pop %v1378
      %v1395 = vmul.f32 %v1378, %v1394
      %vm1396 = vcmp.eq.f32.partialorder %v1378, inf
      %v1397 = vsel %vm1396, %v1378, %v1395
      %vm1398 = vcmp.eq.f32.partialorder %v1378, 0.0
      %v1399 = vand.u32 %v1378, 2147483648
      %v1400 = vsel %vm1398, %v1399, %v1397
      %v1401 = vrsqrt.pop %v1379
      %v1402 = vmul.f32 %v1379, %v1401
      %vm1403 = vcmp.eq.f32.partialorder %v1379, inf
      %v1404 = vsel %vm1403, %v1379, %v1402
      %vm1405 = vcmp.eq.f32.partialorder %v1379, 0.0
      %v1406 = vand.u32 %v1379, 2147483648
      %v1407 = vsel %vm1405, %v1406, %v1404
      %v1408 = vrsqrt.pop %v1380
      %v1409 = vmul.f32 %v1380, %v1408
      %vm1410 = vcmp.eq.f32.partialorder %v1380, inf
      %v1411 = vsel %vm1410, %v1380, %v1409
      %vm1412 = vcmp.eq.f32.partialorder %v1380, 0.0
      %v1413 = vand.u32 %v1380, 2147483648
      %v1414 = vsel %vm1412, %v1413, %v1411
      %v1415 = vrsqrt.pop %v1381
      %v1416 = vmul.f32 %v1381, %v1415
      %vm1417 = vcmp.eq.f32.partialorder %v1381, inf
      %v1418 = vsel %vm1417, %v1381, %v1416
      %vm1419 = vcmp.eq.f32.partialorder %v1381, 0.0
      %v1420 = vand.u32 %v1381, 2147483648
      %v1421 = vsel %vm1419, %v1420, %v1418
      %v1422 = vrsqrt.pop %v1382
      %v1423 = vmul.f32 %v1382, %v1422
      %vm1424 = vcmp.eq.f32.partialorder %v1382, inf
      %v1425 = vsel %vm1424, %v1382, %v1423
      %vm1426 = vcmp.eq.f32.partialorder %v1382, 0.0
      %v1427 = vand.u32 %v1382, 2147483648
      %v1428 = vsel %vm1426, %v1427, %v1425
      %v1429 = vrsqrt.pop %v1383
      %v1430 = vmul.f32 %v1383, %v1429
      %vm1431 = vcmp.eq.f32.partialorder %v1383, inf
      %v1432 = vsel %vm1431, %v1383, %v1430
      %vm1433 = vcmp.eq.f32.partialorder %v1383, 0.0
      %v1434 = vand.u32 %v1383, 2147483648
      %v1435 = vsel %vm1433, %v1434, %v1432
      %v1436 = vrsqrt.pop %v1384
      %v1437 = vmul.f32 %v1384, %v1436
      %vm1438 = vcmp.eq.f32.partialorder %v1384, inf
      %v1439 = vsel %vm1438, %v1384, %v1437
      %vm1440 = vcmp.eq.f32.partialorder %v1384, 0.0
      %v1441 = vand.u32 %v1384, 2147483648
      %v1442 = vsel %vm1440, %v1441, %v1439
      %v1443 = vrsqrt.pop %v1385
      %v1444 = vmul.f32 %v1385, %v1443
      %vm1445 = vcmp.eq.f32.partialorder %v1385, inf
      %v1446 = vsel %vm1445, %v1385, %v1444
      %vm1447 = vcmp.eq.f32.partialorder %v1385, 0.0
      %v1448 = vand.u32 %v1385, 2147483648
      %v1449 = vsel %vm1447, %v1448, %v1446
      %v1450 = vrsqrt.pop %v1386
      %v1451 = vmul.f32 %v1386, %v1450
      %vm1452 = vcmp.eq.f32.partialorder %v1386, inf
      %v1453 = vsel %vm1452, %v1386, %v1451
      %vm1454 = vcmp.eq.f32.partialorder %v1386, 0.0
      %v1455 = vand.u32 %v1386, 2147483648
      %v1456 = vsel %vm1454, %v1455, %v1453
      %v1457 = vrsqrt.pop %v1387
      %v1458 = vmul.f32 %v1387, %v1457
      %vm1459 = vcmp.eq.f32.partialorder %v1387, inf
      %v1460 = vsel %vm1459, %v1387, %v1458
      %vm1461 = vcmp.eq.f32.partialorder %v1387, 0.0
      %v1462 = vand.u32 %v1387, 2147483648
      %v1463 = vsel %vm1461, %v1462, %v1460
      %v1464 = vrsqrt.pop %v1388
      %v1465 = vmul.f32 %v1388, %v1464
      %vm1466 = vcmp.eq.f32.partialorder %v1388, inf
      %v1467 = vsel %vm1466, %v1388, %v1465
      %vm1468 = vcmp.eq.f32.partialorder %v1388, 0.0
      %v1469 = vand.u32 %v1388, 2147483648
      %v1470 = vsel %vm1468, %v1469, %v1467
      %v1471 = vrsqrt.pop %v1389
      %v1472 = vmul.f32 %v1389, %v1471
      %vm1473 = vcmp.eq.f32.partialorder %v1389, inf
      %v1474 = vsel %vm1473, %v1389, %v1472
      %vm1475 = vcmp.eq.f32.partialorder %v1389, 0.0
      %v1476 = vand.u32 %v1389, 2147483648
      %v1477 = vsel %vm1475, %v1476, %v1474
      %v1478 = vrsqrt.pop %v1390
      %v1479 = vmul.f32 %v1390, %v1478
      %vm1480 = vcmp.eq.f32.partialorder %v1390, inf
      %v1481 = vsel %vm1480, %v1390, %v1479
      %vm1482 = vcmp.eq.f32.partialorder %v1390, 0.0
      %v1483 = vand.u32 %v1390, 2147483648
      %v1484 = vsel %vm1482, %v1483, %v1481
      %v1485 = vrsqrt.pop %v1391
      %v1486 = vmul.f32 %v1391, %v1485
      %vm1487 = vcmp.eq.f32.partialorder %v1391, inf
      %v1488 = vsel %vm1487, %v1391, %v1486
      %vm1489 = vcmp.eq.f32.partialorder %v1391, 0.0
      %v1490 = vand.u32 %v1391, 2147483648
      %v1491 = vsel %vm1489, %v1490, %v1488
      %v1492 = vrsqrt.pop %v1392
      %v1493 = vmul.f32 %v1392, %v1492
      %vm1494 = vcmp.eq.f32.partialorder %v1392, inf
      %v1495 = vsel %vm1494, %v1392, %v1493
      %vm1496 = vcmp.eq.f32.partialorder %v1392, 0.0
      %v1497 = vand.u32 %v1392, 2147483648
      %v1498 = vsel %vm1496, %v1497, %v1495
      %v1499 = vrsqrt.pop %v1393
      %v1500 = vmul.f32 %v1393, %v1499
      %vm1501 = vcmp.eq.f32.partialorder %v1393, inf
      %v1502 = vsel %vm1501, %v1393, %v1500
      %vm1503 = vcmp.eq.f32.partialorder %v1393, 0.0
      %v1504 = vand.u32 %v1393, 2147483648
      %v1505 = vsel %vm1503, %v1504, %v1502
      %s1506 = scalar_lea.vmem [#allocation2], %s220
      %v1507 = vld [vmem:[%s1506] sm:$0x1]
      %v1508 = vadd.f32 %v1400, %v1407
      %v1509 = vadd.f32 %v1508, %v1414
      %v1510 = vadd.f32 %v1509, %v1421
      %v1511 = vadd.f32 %v1510, %v1428
      %v1512 = vadd.f32 %v1511, %v1435
      %v1513 = vadd.f32 %v1512, %v1442
      %v1514 = vadd.f32 %v1513, %v1449
      %v1515 = vadd.f32 %v1514, %v1456
      %v1516 = vadd.f32 %v1515, %v1463
      %v1517 = vadd.f32 %v1516, %v1470
      %v1518 = vadd.f32 %v1517, %v1477
      %v1519 = vadd.f32 %v1518, %v1484
      %v1520 = vadd.f32 %v1519, %v1491
      %v1521 = vadd.f32 %v1520, %v1498
      %v1522 = vadd.f32 %v1521, %v1505
      %v1523 = vrot.slane %v1522, 4
      %v1524 = vadd.f32 %v1522, %v1523
      %v1525 = vrot.slane %v1524, 2
      %v1526 = vadd.f32 %v1524, %v1525
      %v1527 = vrot.slane %v1526, 1
      %v1528 = vadd.f32 %v1526, %v1527
      %v1529 = vadd.f32 %v1507, %v1528
      %1530 = vst [vmem:[%s1506] sm:$0x1] %v1529
      %p1531 = scmp.ne.s32.totalorder %s219, %s220
      // Predicated region
      $region33: #{local_density_prob.1} parent=27 // pred_check
        %p1532 = pneg %p1531
      $region34: #{local_density_prob.1} parent=27 // pred_check_branch
        %1534 = sbr.rel (%p1532) target = $region36
      $region35: #{local_density_prob.1} parent=27 // pred_region
        %s1535 = scalar_lea.vmem [#allocation2], %s219
        %v1536 = vld [vmem:[%s1535] sm:$0x1]
        %1537 = vadd.xlane.f32.xlu0 %v1400
        %v1538 = vpop.xlane.xlu0 %1537
        %1539 = vadd.xlane.f32.xlu0 %v1407
        %v1540 = vpop.xlane.xlu0 %1539
        %1541 = vadd.xlane.f32.xlu0 %v1414
        %v1542 = vpop.xlane.xlu0 %1541
        %1543 = vadd.xlane.f32.xlu0 %v1421
        %v1544 = vpop.xlane.xlu0 %1543
        %1545 = vadd.xlane.f32.xlu0 %v1428
        %v1546 = vpop.xlane.xlu0 %1545
        %1547 = vadd.xlane.f32.xlu0 %v1435
        %v1548 = vpop.xlane.xlu0 %1547
        %1549 = vadd.xlane.f32.xlu0 %v1442
        %v1550 = vpop.xlane.xlu0 %1549
        %1551 = vadd.xlane.f32.xlu0 %v1449
        %v1552 = vpop.xlane.xlu0 %1551
        %1553 = vadd.xlane.f32.xlu0 %v1456
        %v1554 = vpop.xlane.xlu0 %1553
        %1555 = vadd.xlane.f32.xlu0 %v1463
        %v1556 = vpop.xlane.xlu0 %1555
        %1557 = vadd.xlane.f32.xlu0 %v1470
        %v1558 = vpop.xlane.xlu0 %1557
        %1559 = vadd.xlane.f32.xlu0 %v1477
        %v1560 = vpop.xlane.xlu0 %1559
        %1561 = vadd.xlane.f32.xlu0 %v1484
        %v1562 = vpop.xlane.xlu0 %1561
        %1563 = vadd.xlane.f32.xlu0 %v1491
        %v1564 = vpop.xlane.xlu0 %1563
        %1565 = vadd.xlane.f32.xlu0 %v1498
        %v1566 = vpop.xlane.xlu0 %1565
        %1567 = vadd.xlane.f32.xlu0 %v1505
        %v1568 = vpop.xlane.xlu0 %1567
        %v1585 = vlaneseq
        %v1586 = vshrl.u32 %v1585, 7
        %v1587 = vsub.s32 0, %v1586
        %v1588 = vrot.slane %v1538, %v1587
        %v1589 = vlaneseq
        %v1590 = vshrl.u32 %v1589, 7
        %v1591 = vsub.s32 1, %v1590
        %v1592 = vrot.slane %v1538, %v1591
        %v1593 = vlaneseq
        %v1594 = vshrl.u32 %v1593, 7
        %v1595 = vsub.s32 2, %v1594
        %v1596 = vrot.slane %v1538, %v1595
        %v1597 = vlaneseq
        %v1598 = vshrl.u32 %v1597, 7
        %v1599 = vsub.s32 3, %v1598
        %v1600 = vrot.slane %v1538, %v1599
        %v1601 = vlaneseq
        %v1602 = vshrl.u32 %v1601, 7
        %v1603 = vsub.s32 4, %v1602
        %v1604 = vrot.slane %v1538, %v1603
        %v1605 = vlaneseq
        %v1606 = vshrl.u32 %v1605, 7
        %v1607 = vsub.s32 5, %v1606
        %v1608 = vrot.slane %v1538, %v1607
        %v1609 = vlaneseq
        %v1610 = vshrl.u32 %v1609, 7
        %v1611 = vsub.s32 6, %v1610
        %v1612 = vrot.slane %v1538, %v1611
        %v1613 = vlaneseq
        %v1614 = vshrl.u32 %v1613, 7
        %v1615 = vsub.s32 7, %v1614
        %v1616 = vrot.slane %v1538, %v1615
        %v1617 = vlaneseq
        %v1618 = vshrl.u32 %v1617, 7
        %v1619 = vsub.s32 0, %v1618
        %v1620 = vrot.slane %v1540, %v1619
        %v1621 = vlaneseq
        %v1622 = vshrl.u32 %v1621, 7
        %v1623 = vsub.s32 1, %v1622
        %v1624 = vrot.slane %v1540, %v1623
        %v1625 = vlaneseq
        %v1626 = vshrl.u32 %v1625, 7
        %v1627 = vsub.s32 2, %v1626
        %v1628 = vrot.slane %v1540, %v1627
        %v1629 = vlaneseq
        %v1630 = vshrl.u32 %v1629, 7
        %v1631 = vsub.s32 3, %v1630
        %v1632 = vrot.slane %v1540, %v1631
        %v1633 = vlaneseq
        %v1634 = vshrl.u32 %v1633, 7
        %v1635 = vsub.s32 4, %v1634
        %v1636 = vrot.slane %v1540, %v1635
        %v1637 = vlaneseq
        %v1638 = vshrl.u32 %v1637, 7
        %v1639 = vsub.s32 5, %v1638
        %v1640 = vrot.slane %v1540, %v1639
        %v1641 = vlaneseq
        %v1642 = vshrl.u32 %v1641, 7
        %v1643 = vsub.s32 6, %v1642
        %v1644 = vrot.slane %v1540, %v1643
        %v1645 = vlaneseq
        %v1646 = vshrl.u32 %v1645, 7
        %v1647 = vsub.s32 7, %v1646
        %v1648 = vrot.slane %v1540, %v1647
        %v1649 = vlaneseq
        %v1650 = vshrl.u32 %v1649, 7
        %v1651 = vsub.s32 0, %v1650
        %v1652 = vrot.slane %v1542, %v1651
        %v1653 = vlaneseq
        %v1654 = vshrl.u32 %v1653, 7
        %v1655 = vsub.s32 1, %v1654
        %v1656 = vrot.slane %v1542, %v1655
        %v1657 = vlaneseq
        %v1658 = vshrl.u32 %v1657, 7
        %v1659 = vsub.s32 2, %v1658
        %v1660 = vrot.slane %v1542, %v1659
        %v1661 = vlaneseq
        %v1662 = vshrl.u32 %v1661, 7
        %v1663 = vsub.s32 3, %v1662
        %v1664 = vrot.slane %v1542, %v1663
        %v1665 = vlaneseq
        %v1666 = vshrl.u32 %v1665, 7
        %v1667 = vsub.s32 4, %v1666
        %v1668 = vrot.slane %v1542, %v1667
        %v1669 = vlaneseq
        %v1670 = vshrl.u32 %v1669, 7
        %v1671 = vsub.s32 5, %v1670
        %v1672 = vrot.slane %v1542, %v1671
        %v1673 = vlaneseq
        %v1674 = vshrl.u32 %v1673, 7
        %v1675 = vsub.s32 6, %v1674
        %v1676 = vrot.slane %v1542, %v1675
        %v1677 = vlaneseq
        %v1678 = vshrl.u32 %v1677, 7
        %v1679 = vsub.s32 7, %v1678
        %v1680 = vrot.slane %v1542, %v1679
        %v1681 = vlaneseq
        %v1682 = vshrl.u32 %v1681, 7
        %v1683 = vsub.s32 0, %v1682
        %v1684 = vrot.slane %v1544, %v1683
        %v1685 = vlaneseq
        %v1686 = vshrl.u32 %v1685, 7
        %v1687 = vsub.s32 1, %v1686
        %v1688 = vrot.slane %v1544, %v1687
        %v1689 = vlaneseq
        %v1690 = vshrl.u32 %v1689, 7
        %v1691 = vsub.s32 2, %v1690
        %v1692 = vrot.slane %v1544, %v1691
        %v1693 = vlaneseq
        %v1694 = vshrl.u32 %v1693, 7
        %v1695 = vsub.s32 3, %v1694
        %v1696 = vrot.slane %v1544, %v1695
        %v1697 = vlaneseq
        %v1698 = vshrl.u32 %v1697, 7
        %v1699 = vsub.s32 4, %v1698
        %v1700 = vrot.slane %v1544, %v1699
        %v1701 = vlaneseq
        %v1702 = vshrl.u32 %v1701, 7
        %v1703 = vsub.s32 5, %v1702
        %v1704 = vrot.slane %v1544, %v1703
        %v1705 = vlaneseq
        %v1706 = vshrl.u32 %v1705, 7
        %v1707 = vsub.s32 6, %v1706
        %v1708 = vrot.slane %v1544, %v1707
        %v1709 = vlaneseq
        %v1710 = vshrl.u32 %v1709, 7
        %v1711 = vsub.s32 7, %v1710
        %v1712 = vrot.slane %v1544, %v1711
        %v1713 = vlaneseq
        %v1714 = vshrl.u32 %v1713, 7
        %v1715 = vsub.s32 0, %v1714
        %v1716 = vrot.slane %v1546, %v1715
        %v1717 = vlaneseq
        %v1718 = vshrl.u32 %v1717, 7
        %v1719 = vsub.s32 1, %v1718
        %v1720 = vrot.slane %v1546, %v1719
        %v1721 = vlaneseq
        %v1722 = vshrl.u32 %v1721, 7
        %v1723 = vsub.s32 2, %v1722
        %v1724 = vrot.slane %v1546, %v1723
        %v1725 = vlaneseq
        %v1726 = vshrl.u32 %v1725, 7
        %v1727 = vsub.s32 3, %v1726
        %v1728 = vrot.slane %v1546, %v1727
        %v1729 = vlaneseq
        %v1730 = vshrl.u32 %v1729, 7
        %v1731 = vsub.s32 4, %v1730
        %v1732 = vrot.slane %v1546, %v1731
        %v1733 = vlaneseq
        %v1734 = vshrl.u32 %v1733, 7
        %v1735 = vsub.s32 5, %v1734
        %v1736 = vrot.slane %v1546, %v1735
        %v1737 = vlaneseq
        %v1738 = vshrl.u32 %v1737, 7
        %v1739 = vsub.s32 6, %v1738
        %v1740 = vrot.slane %v1546, %v1739
        %v1741 = vlaneseq
        %v1742 = vshrl.u32 %v1741, 7
        %v1743 = vsub.s32 7, %v1742
        %v1744 = vrot.slane %v1546, %v1743
        %v1745 = vlaneseq
        %v1746 = vshrl.u32 %v1745, 7
        %v1747 = vsub.s32 0, %v1746
        %v1748 = vrot.slane %v1548, %v1747
        %v1749 = vlaneseq
        %v1750 = vshrl.u32 %v1749, 7
        %v1751 = vsub.s32 1, %v1750
        %v1752 = vrot.slane %v1548, %v1751
        %v1753 = vlaneseq
        %v1754 = vshrl.u32 %v1753, 7
        %v1755 = vsub.s32 2, %v1754
        %v1756 = vrot.slane %v1548, %v1755
        %v1757 = vlaneseq
        %v1758 = vshrl.u32 %v1757, 7
        %v1759 = vsub.s32 3, %v1758
        %v1760 = vrot.slane %v1548, %v1759
        %v1761 = vlaneseq
        %v1762 = vshrl.u32 %v1761, 7
        %v1763 = vsub.s32 4, %v1762
        %v1764 = vrot.slane %v1548, %v1763
        %v1765 = vlaneseq
        %v1766 = vshrl.u32 %v1765, 7
        %v1767 = vsub.s32 5, %v1766
        %v1768 = vrot.slane %v1548, %v1767
        %v1769 = vlaneseq
        %v1770 = vshrl.u32 %v1769, 7
        %v1771 = vsub.s32 6, %v1770
        %v1772 = vrot.slane %v1548, %v1771
        %v1773 = vlaneseq
        %v1774 = vshrl.u32 %v1773, 7
        %v1775 = vsub.s32 7, %v1774
        %v1776 = vrot.slane %v1548, %v1775
        %v1777 = vlaneseq
        %v1778 = vshrl.u32 %v1777, 7
        %v1779 = vsub.s32 0, %v1778
        %v1780 = vrot.slane %v1550, %v1779
        %v1781 = vlaneseq
        %v1782 = vshrl.u32 %v1781, 7
        %v1783 = vsub.s32 1, %v1782
        %v1784 = vrot.slane %v1550, %v1783
        %v1785 = vlaneseq
        %v1786 = vshrl.u32 %v1785, 7
        %v1787 = vsub.s32 2, %v1786
        %v1788 = vrot.slane %v1550, %v1787
        %v1789 = vlaneseq
        %v1790 = vshrl.u32 %v1789, 7
        %v1791 = vsub.s32 3, %v1790
        %v1792 = vrot.slane %v1550, %v1791
        %v1793 = vlaneseq
        %v1794 = vshrl.u32 %v1793, 7
        %v1795 = vsub.s32 4, %v1794
        %v1796 = vrot.slane %v1550, %v1795
        %v1797 = vlaneseq
        %v1798 = vshrl.u32 %v1797, 7
        %v1799 = vsub.s32 5, %v1798
        %v1800 = vrot.slane %v1550, %v1799
        %v1801 = vlaneseq
        %v1802 = vshrl.u32 %v1801, 7
        %v1803 = vsub.s32 6, %v1802
        %v1804 = vrot.slane %v1550, %v1803
        %v1805 = vlaneseq
        %v1806 = vshrl.u32 %v1805, 7
        %v1807 = vsub.s32 7, %v1806
        %v1808 = vrot.slane %v1550, %v1807
        %v1809 = vlaneseq
        %v1810 = vshrl.u32 %v1809, 7
        %v1811 = vsub.s32 0, %v1810
        %v1812 = vrot.slane %v1552, %v1811
        %v1813 = vlaneseq
        %v1814 = vshrl.u32 %v1813, 7
        %v1815 = vsub.s32 1, %v1814
        %v1816 = vrot.slane %v1552, %v1815
        %v1817 = vlaneseq
        %v1818 = vshrl.u32 %v1817, 7
        %v1819 = vsub.s32 2, %v1818
        %v1820 = vrot.slane %v1552, %v1819
        %v1821 = vlaneseq
        %v1822 = vshrl.u32 %v1821, 7
        %v1823 = vsub.s32 3, %v1822
        %v1824 = vrot.slane %v1552, %v1823
        %v1825 = vlaneseq
        %v1826 = vshrl.u32 %v1825, 7
        %v1827 = vsub.s32 4, %v1826
        %v1828 = vrot.slane %v1552, %v1827
        %v1829 = vlaneseq
        %v1830 = vshrl.u32 %v1829, 7
        %v1831 = vsub.s32 5, %v1830
        %v1832 = vrot.slane %v1552, %v1831
        %v1833 = vlaneseq
        %v1834 = vshrl.u32 %v1833, 7
        %v1835 = vsub.s32 6, %v1834
        %v1836 = vrot.slane %v1552, %v1835
        %v1837 = vlaneseq
        %v1838 = vshrl.u32 %v1837, 7
        %v1839 = vsub.s32 7, %v1838
        %v1840 = vrot.slane %v1552, %v1839
        %v1841 = vlaneseq
        %v1842 = vshrl.u32 %v1841, 7
        %v1843 = vsub.s32 0, %v1842
        %v1844 = vrot.slane %v1554, %v1843
        %v1845 = vlaneseq
        %v1846 = vshrl.u32 %v1845, 7
        %v1847 = vsub.s32 1, %v1846
        %v1848 = vrot.slane %v1554, %v1847
        %v1849 = vlaneseq
        %v1850 = vshrl.u32 %v1849, 7
        %v1851 = vsub.s32 2, %v1850
        %v1852 = vrot.slane %v1554, %v1851
        %v1853 = vlaneseq
        %v1854 = vshrl.u32 %v1853, 7
        %v1855 = vsub.s32 3, %v1854
        %v1856 = vrot.slane %v1554, %v1855
        %v1857 = vlaneseq
        %v1858 = vshrl.u32 %v1857, 7
        %v1859 = vsub.s32 4, %v1858
        %v1860 = vrot.slane %v1554, %v1859
        %v1861 = vlaneseq
        %v1862 = vshrl.u32 %v1861, 7
        %v1863 = vsub.s32 5, %v1862
        %v1864 = vrot.slane %v1554, %v1863
        %v1865 = vlaneseq
        %v1866 = vshrl.u32 %v1865, 7
        %v1867 = vsub.s32 6, %v1866
        %v1868 = vrot.slane %v1554, %v1867
        %v1869 = vlaneseq
        %v1870 = vshrl.u32 %v1869, 7
        %v1871 = vsub.s32 7, %v1870
        %v1872 = vrot.slane %v1554, %v1871
        %v1873 = vlaneseq
        %v1874 = vshrl.u32 %v1873, 7
        %v1875 = vsub.s32 0, %v1874
        %v1876 = vrot.slane %v1556, %v1875
        %v1877 = vlaneseq
        %v1878 = vshrl.u32 %v1877, 7
        %v1879 = vsub.s32 1, %v1878
        %v1880 = vrot.slane %v1556, %v1879
        %v1881 = vlaneseq
        %v1882 = vshrl.u32 %v1881, 7
        %v1883 = vsub.s32 2, %v1882
        %v1884 = vrot.slane %v1556, %v1883
        %v1885 = vlaneseq
        %v1886 = vshrl.u32 %v1885, 7
        %v1887 = vsub.s32 3, %v1886
        %v1888 = vrot.slane %v1556, %v1887
        %v1889 = vlaneseq
        %v1890 = vshrl.u32 %v1889, 7
        %v1891 = vsub.s32 4, %v1890
        %v1892 = vrot.slane %v1556, %v1891
        %v1893 = vlaneseq
        %v1894 = vshrl.u32 %v1893, 7
        %v1895 = vsub.s32 5, %v1894
        %v1896 = vrot.slane %v1556, %v1895
        %v1897 = vlaneseq
        %v1898 = vshrl.u32 %v1897, 7
        %v1899 = vsub.s32 6, %v1898
        %v1900 = vrot.slane %v1556, %v1899
        %v1901 = vlaneseq
        %v1902 = vshrl.u32 %v1901, 7
        %v1903 = vsub.s32 7, %v1902
        %v1904 = vrot.slane %v1556, %v1903
        %v1905 = vlaneseq
        %v1906 = vshrl.u32 %v1905, 7
        %v1907 = vsub.s32 0, %v1906
        %v1908 = vrot.slane %v1558, %v1907
        %v1909 = vlaneseq
        %v1910 = vshrl.u32 %v1909, 7
        %v1911 = vsub.s32 1, %v1910
        %v1912 = vrot.slane %v1558, %v1911
        %v1913 = vlaneseq
        %v1914 = vshrl.u32 %v1913, 7
        %v1915 = vsub.s32 2, %v1914
        %v1916 = vrot.slane %v1558, %v1915
        %v1917 = vlaneseq
        %v1918 = vshrl.u32 %v1917, 7
        %v1919 = vsub.s32 3, %v1918
        %v1920 = vrot.slane %v1558, %v1919
        %v1921 = vlaneseq
        %v1922 = vshrl.u32 %v1921, 7
        %v1923 = vsub.s32 4, %v1922
        %v1924 = vrot.slane %v1558, %v1923
        %v1925 = vlaneseq
        %v1926 = vshrl.u32 %v1925, 7
        %v1927 = vsub.s32 5, %v1926
        %v1928 = vrot.slane %v1558, %v1927
        %v1929 = vlaneseq
        %v1930 = vshrl.u32 %v1929, 7
        %v1931 = vsub.s32 6, %v1930
        %v1932 = vrot.slane %v1558, %v1931
        %v1933 = vlaneseq
        %v1934 = vshrl.u32 %v1933, 7
        %v1935 = vsub.s32 7, %v1934
        %v1936 = vrot.slane %v1558, %v1935
        %v1937 = vlaneseq
        %v1938 = vshrl.u32 %v1937, 7
        %v1939 = vsub.s32 0, %v1938
        %v1940 = vrot.slane %v1560, %v1939
        %v1941 = vlaneseq
        %v1942 = vshrl.u32 %v1941, 7
        %v1943 = vsub.s32 1, %v1942
        %v1944 = vrot.slane %v1560, %v1943
        %v1945 = vlaneseq
        %v1946 = vshrl.u32 %v1945, 7
        %v1947 = vsub.s32 2, %v1946
        %v1948 = vrot.slane %v1560, %v1947
        %v1949 = vlaneseq
        %v1950 = vshrl.u32 %v1949, 7
        %v1951 = vsub.s32 3, %v1950
        %v1952 = vrot.slane %v1560, %v1951
        %v1953 = vlaneseq
        %v1954 = vshrl.u32 %v1953, 7
        %v1955 = vsub.s32 4, %v1954
        %v1956 = vrot.slane %v1560, %v1955
        %v1957 = vlaneseq
        %v1958 = vshrl.u32 %v1957, 7
        %v1959 = vsub.s32 5, %v1958
        %v1960 = vrot.slane %v1560, %v1959
        %v1961 = vlaneseq
        %v1962 = vshrl.u32 %v1961, 7
        %v1963 = vsub.s32 6, %v1962
        %v1964 = vrot.slane %v1560, %v1963
        %v1965 = vlaneseq
        %v1966 = vshrl.u32 %v1965, 7
        %v1967 = vsub.s32 7, %v1966
        %v1968 = vrot.slane %v1560, %v1967
        %v1969 = vlaneseq
        %v1970 = vshrl.u32 %v1969, 7
        %v1971 = vsub.s32 0, %v1970
        %v1972 = vrot.slane %v1562, %v1971
        %v1973 = vlaneseq
        %v1974 = vshrl.u32 %v1973, 7
        %v1975 = vsub.s32 1, %v1974
        %v1976 = vrot.slane %v1562, %v1975
        %v1977 = vlaneseq
        %v1978 = vshrl.u32 %v1977, 7
        %v1979 = vsub.s32 2, %v1978
        %v1980 = vrot.slane %v1562, %v1979
        %v1981 = vlaneseq
        %v1982 = vshrl.u32 %v1981, 7
        %v1983 = vsub.s32 3, %v1982
        %v1984 = vrot.slane %v1562, %v1983
        %v1985 = vlaneseq
        %v1986 = vshrl.u32 %v1985, 7
        %v1987 = vsub.s32 4, %v1986
        %v1988 = vrot.slane %v1562, %v1987
        %v1989 = vlaneseq
        %v1990 = vshrl.u32 %v1989, 7
        %v1991 = vsub.s32 5, %v1990
        %v1992 = vrot.slane %v1562, %v1991
        %v1993 = vlaneseq
        %v1994 = vshrl.u32 %v1993, 7
        %v1995 = vsub.s32 6, %v1994
        %v1996 = vrot.slane %v1562, %v1995
        %v1997 = vlaneseq
        %v1998 = vshrl.u32 %v1997, 7
        %v1999 = vsub.s32 7, %v1998
        %v2000 = vrot.slane %v1562, %v1999
        %v2001 = vlaneseq
        %v2002 = vshrl.u32 %v2001, 7
        %v2003 = vsub.s32 0, %v2002
        %v2004 = vrot.slane %v1564, %v2003
        %v2005 = vlaneseq
        %v2006 = vshrl.u32 %v2005, 7
        %v2007 = vsub.s32 1, %v2006
        %v2008 = vrot.slane %v1564, %v2007
        %v2009 = vlaneseq
        %v2010 = vshrl.u32 %v2009, 7
        %v2011 = vsub.s32 2, %v2010
        %v2012 = vrot.slane %v1564, %v2011
        %v2013 = vlaneseq
        %v2014 = vshrl.u32 %v2013, 7
        %v2015 = vsub.s32 3, %v2014
        %v2016 = vrot.slane %v1564, %v2015
        %v2017 = vlaneseq
        %v2018 = vshrl.u32 %v2017, 7
        %v2019 = vsub.s32 4, %v2018
        %v2020 = vrot.slane %v1564, %v2019
        %v2021 = vlaneseq
        %v2022 = vshrl.u32 %v2021, 7
        %v2023 = vsub.s32 5, %v2022
        %v2024 = vrot.slane %v1564, %v2023
        %v2025 = vlaneseq
        %v2026 = vshrl.u32 %v2025, 7
        %v2027 = vsub.s32 6, %v2026
        %v2028 = vrot.slane %v1564, %v2027
        %v2029 = vlaneseq
        %v2030 = vshrl.u32 %v2029, 7
        %v2031 = vsub.s32 7, %v2030
        %v2032 = vrot.slane %v1564, %v2031
        %v2033 = vlaneseq
        %v2034 = vshrl.u32 %v2033, 7
        %v2035 = vsub.s32 0, %v2034
        %v2036 = vrot.slane %v1566, %v2035
        %v2037 = vlaneseq
        %v2038 = vshrl.u32 %v2037, 7
        %v2039 = vsub.s32 1, %v2038
        %v2040 = vrot.slane %v1566, %v2039
        %v2041 = vlaneseq
        %v2042 = vshrl.u32 %v2041, 7
        %v2043 = vsub.s32 2, %v2042
        %v2044 = vrot.slane %v1566, %v2043
        %v2045 = vlaneseq
        %v2046 = vshrl.u32 %v2045, 7
        %v2047 = vsub.s32 3, %v2046
        %v2048 = vrot.slane %v1566, %v2047
        %v2049 = vlaneseq
        %v2050 = vshrl.u32 %v2049, 7
        %v2051 = vsub.s32 4, %v2050
        %v2052 = vrot.slane %v1566, %v2051
        %v2053 = vlaneseq
        %v2054 = vshrl.u32 %v2053, 7
        %v2055 = vsub.s32 5, %v2054
        %v2056 = vrot.slane %v1566, %v2055
        %v2057 = vlaneseq
        %v2058 = vshrl.u32 %v2057, 7
        %v2059 = vsub.s32 6, %v2058
        %v2060 = vrot.slane %v1566, %v2059
        %v2061 = vlaneseq
        %v2062 = vshrl.u32 %v2061, 7
        %v2063 = vsub.s32 7, %v2062
        %v2064 = vrot.slane %v1566, %v2063
        %v2065 = vlaneseq
        %v2066 = vshrl.u32 %v2065, 7
        %v2067 = vsub.s32 0, %v2066
        %v2068 = vrot.slane %v1568, %v2067
        %v2069 = vlaneseq
        %v2070 = vshrl.u32 %v2069, 7
        %v2071 = vsub.s32 1, %v2070
        %v2072 = vrot.slane %v1568, %v2071
        %v2073 = vlaneseq
        %v2074 = vshrl.u32 %v2073, 7
        %v2075 = vsub.s32 2, %v2074
        %v2076 = vrot.slane %v1568, %v2075
        %v2077 = vlaneseq
        %v2078 = vshrl.u32 %v2077, 7
        %v2079 = vsub.s32 3, %v2078
        %v2080 = vrot.slane %v1568, %v2079
        %v2081 = vlaneseq
        %v2082 = vshrl.u32 %v2081, 7
        %v2083 = vsub.s32 4, %v2082
        %v2084 = vrot.slane %v1568, %v2083
        %v2085 = vlaneseq
        %v2086 = vshrl.u32 %v2085, 7
        %v2087 = vsub.s32 5, %v2086
        %v2088 = vrot.slane %v1568, %v2087
        %v2089 = vlaneseq
        %v2090 = vshrl.u32 %v2089, 7
        %v2091 = vsub.s32 6, %v2090
        %v2092 = vrot.slane %v1568, %v2091
        %v2093 = vlaneseq
        %v2094 = vshrl.u32 %v2093, 7
        %v2095 = vsub.s32 7, %v2094
        %v2096 = vrot.slane %v1568, %v2095
        %v2097 = vcombine.low %v1588, %v1592
        %v2098 = vcombine.low %v1596, %v1600
        %v2099 = vcombine.low %v1604, %v1608
        %v2100 = vcombine.low %v1612, %v1616
        %v2102 = vunpack.c.l.s4 1966171168
        %v2103 = vunpack.c.0.s8 %v2102
        %v2104 = vlaneseq
        %v2105 = vshrl.u32 %v2104, 7
        %v2106 = vsub.s32 %v2103, %v2105
        %v2107 = vrot.slane %v2097, %v2106
        %v2109 = vunpack.c.l.s4 1966171168
        %v2110 = vunpack.c.0.s8 %v2109
        %v2111 = vlaneseq
        %v2112 = vshrl.u32 %v2111, 7
        %v2113 = vsub.s32 %v2110, %v2112
        %v2114 = vrot.slane %v2098, %v2113
        %v2116 = vunpack.c.l.s4 1966171168
        %v2117 = vunpack.c.0.s8 %v2116
        %v2118 = vlaneseq
        %v2119 = vshrl.u32 %v2118, 7
        %v2120 = vsub.s32 %v2117, %v2119
        %v2121 = vrot.slane %v2099, %v2120
        %v2123 = vunpack.c.l.s4 1966171168
        %v2124 = vunpack.c.0.s8 %v2123
        %v2125 = vlaneseq
        %v2126 = vshrl.u32 %v2125, 7
        %v2127 = vsub.s32 %v2124, %v2126
        %v2128 = vrot.slane %v2100, %v2127
        %v2129 = vcombine.low %v2107, %v2114
        %v2130 = vcombine.low %v2121, %v2128
        %v2132 = vunpack.c.l.s4 1966171168
        %v2133 = vunpack.c.0.s8 %v2132
        %v2134 = vlaneseq
        %v2135 = vshrl.u32 %v2134, 7
        %v2136 = vsub.s32 %v2133, %v2135
        %v2137 = vrot.slane %v2129, %v2136
        %v2139 = vunpack.c.l.s4 1966171168
        %v2140 = vunpack.c.0.s8 %v2139
        %v2141 = vlaneseq
        %v2142 = vshrl.u32 %v2141, 7
        %v2143 = vsub.s32 %v2140, %v2142
        %v2144 = vrot.slane %v2130, %v2143
        %v2145 = vcombine.low %v2137, %v2144
        %v2146 = vcombine.low %v1620, %v1624
        %v2147 = vcombine.low %v1628, %v1632
        %v2148 = vcombine.low %v1636, %v1640
        %v2149 = vcombine.low %v1644, %v1648
        %v2151 = vunpack.c.l.s4 1966171168
        %v2152 = vunpack.c.0.s8 %v2151
        %v2153 = vlaneseq
        %v2154 = vshrl.u32 %v2153, 7
        %v2155 = vsub.s32 %v2152, %v2154
        %v2156 = vrot.slane %v2146, %v2155
        %v2158 = vunpack.c.l.s4 1966171168
        %v2159 = vunpack.c.0.s8 %v2158
        %v2160 = vlaneseq
        %v2161 = vshrl.u32 %v2160, 7
        %v2162 = vsub.s32 %v2159, %v2161
        %v2163 = vrot.slane %v2147, %v2162
        %v2165 = vunpack.c.l.s4 1966171168
        %v2166 = vunpack.c.0.s8 %v2165
        %v2167 = vlaneseq
        %v2168 = vshrl.u32 %v2167, 7
        %v2169 = vsub.s32 %v2166, %v2168
        %v2170 = vrot.slane %v2148, %v2169
        %v2172 = vunpack.c.l.s4 1966171168
        %v2173 = vunpack.c.0.s8 %v2172
        %v2174 = vlaneseq
        %v2175 = vshrl.u32 %v2174, 7
        %v2176 = vsub.s32 %v2173, %v2175
        %v2177 = vrot.slane %v2149, %v2176
        %v2178 = vcombine.low %v2156, %v2163
        %v2179 = vcombine.low %v2170, %v2177
        %v2181 = vunpack.c.l.s4 1966171168
        %v2182 = vunpack.c.0.s8 %v2181
        %v2183 = vlaneseq
        %v2184 = vshrl.u32 %v2183, 7
        %v2185 = vsub.s32 %v2182, %v2184
        %v2186 = vrot.slane %v2178, %v2185
        %v2188 = vunpack.c.l.s4 1966171168
        %v2189 = vunpack.c.0.s8 %v2188
        %v2190 = vlaneseq
        %v2191 = vshrl.u32 %v2190, 7
        %v2192 = vsub.s32 %v2189, %v2191
        %v2193 = vrot.slane %v2179, %v2192
        %v2194 = vcombine.low %v2186, %v2193
        %v2195 = vcombine.low %v1652, %v1656
        %v2196 = vcombine.low %v1660, %v1664
        %v2197 = vcombine.low %v1668, %v1672
        %v2198 = vcombine.low %v1676, %v1680
        %v2200 = vunpack.c.l.s4 1966171168
        %v2201 = vunpack.c.0.s8 %v2200
        %v2202 = vlaneseq
        %v2203 = vshrl.u32 %v2202, 7
        %v2204 = vsub.s32 %v2201, %v2203
        %v2205 = vrot.slane %v2195, %v2204
        %v2207 = vunpack.c.l.s4 1966171168
        %v2208 = vunpack.c.0.s8 %v2207
        %v2209 = vlaneseq
        %v2210 = vshrl.u32 %v2209, 7
        %v2211 = vsub.s32 %v2208, %v2210
        %v2212 = vrot.slane %v2196, %v2211
        %v2214 = vunpack.c.l.s4 1966171168
        %v2215 = vunpack.c.0.s8 %v2214
        %v2216 = vlaneseq
        %v2217 = vshrl.u32 %v2216, 7
        %v2218 = vsub.s32 %v2215, %v2217
        %v2219 = vrot.slane %v2197, %v2218
        %v2221 = vunpack.c.l.s4 1966171168
        %v2222 = vunpack.c.0.s8 %v2221
        %v2223 = vlaneseq
        %v2224 = vshrl.u32 %v2223, 7
        %v2225 = vsub.s32 %v2222, %v2224
        %v2226 = vrot.slane %v2198, %v2225
        %v2227 = vcombine.low %v2205, %v2212
        %v2228 = vcombine.low %v2219, %v2226
        %v2230 = vunpack.c.l.s4 1966171168
        %v2231 = vunpack.c.0.s8 %v2230
        %v2232 = vlaneseq
        %v2233 = vshrl.u32 %v2232, 7
        %v2234 = vsub.s32 %v2231, %v2233
        %v2235 = vrot.slane %v2227, %v2234
        %v2237 = vunpack.c.l.s4 1966171168
        %v2238 = vunpack.c.0.s8 %v2237
        %v2239 = vlaneseq
        %v2240 = vshrl.u32 %v2239, 7
        %v2241 = vsub.s32 %v2238, %v2240
        %v2242 = vrot.slane %v2228, %v2241
        %v2243 = vcombine.low %v2235, %v2242
        %v2244 = vcombine.low %v1684, %v1688
        %v2245 = vcombine.low %v1692, %v1696
        %v2246 = vcombine.low %v1700, %v1704
        %v2247 = vcombine.low %v1708, %v1712
        %v2249 = vunpack.c.l.s4 1966171168
        %v2250 = vunpack.c.0.s8 %v2249
        %v2251 = vlaneseq
        %v2252 = vshrl.u32 %v2251, 7
        %v2253 = vsub.s32 %v2250, %v2252
        %v2254 = vrot.slane %v2244, %v2253
        %v2256 = vunpack.c.l.s4 1966171168
        %v2257 = vunpack.c.0.s8 %v2256
        %v2258 = vlaneseq
        %v2259 = vshrl.u32 %v2258, 7
        %v2260 = vsub.s32 %v2257, %v2259
        %v2261 = vrot.slane %v2245, %v2260
        %v2263 = vunpack.c.l.s4 1966171168
        %v2264 = vunpack.c.0.s8 %v2263
        %v2265 = vlaneseq
        %v2266 = vshrl.u32 %v2265, 7
        %v2267 = vsub.s32 %v2264, %v2266
        %v2268 = vrot.slane %v2246, %v2267
        %v2270 = vunpack.c.l.s4 1966171168
        %v2271 = vunpack.c.0.s8 %v2270
        %v2272 = vlaneseq
        %v2273 = vshrl.u32 %v2272, 7
        %v2274 = vsub.s32 %v2271, %v2273
        %v2275 = vrot.slane %v2247, %v2274
        %v2276 = vcombine.low %v2254, %v2261
        %v2277 = vcombine.low %v2268, %v2275
        %v2279 = vunpack.c.l.s4 1966171168
        %v2280 = vunpack.c.0.s8 %v2279
        %v2281 = vlaneseq
        %v2282 = vshrl.u32 %v2281, 7
        %v2283 = vsub.s32 %v2280, %v2282
        %v2284 = vrot.slane %v2276, %v2283
        %v2286 = vunpack.c.l.s4 1966171168
        %v2287 = vunpack.c.0.s8 %v2286
        %v2288 = vlaneseq
        %v2289 = vshrl.u32 %v2288, 7
        %v2290 = vsub.s32 %v2287, %v2289
        %v2291 = vrot.slane %v2277, %v2290
        %v2292 = vcombine.low %v2284, %v2291
        %v2293 = vcombine.low %v1716, %v1720
        %v2294 = vcombine.low %v1724, %v1728
        %v2295 = vcombine.low %v1732, %v1736
        %v2296 = vcombine.low %v1740, %v1744
        %v2298 = vunpack.c.l.s4 1966171168
        %v2299 = vunpack.c.0.s8 %v2298
        %v2300 = vlaneseq
        %v2301 = vshrl.u32 %v2300, 7
        %v2302 = vsub.s32 %v2299, %v2301
        %v2303 = vrot.slane %v2293, %v2302
        %v2305 = vunpack.c.l.s4 1966171168
        %v2306 = vunpack.c.0.s8 %v2305
        %v2307 = vlaneseq
        %v2308 = vshrl.u32 %v2307, 7
        %v2309 = vsub.s32 %v2306, %v2308
        %v2310 = vrot.slane %v2294, %v2309
        %v2312 = vunpack.c.l.s4 1966171168
        %v2313 = vunpack.c.0.s8 %v2312
        %v2314 = vlaneseq
        %v2315 = vshrl.u32 %v2314, 7
        %v2316 = vsub.s32 %v2313, %v2315
        %v2317 = vrot.slane %v2295, %v2316
        %v2319 = vunpack.c.l.s4 1966171168
        %v2320 = vunpack.c.0.s8 %v2319
        %v2321 = vlaneseq
        %v2322 = vshrl.u32 %v2321, 7
        %v2323 = vsub.s32 %v2320, %v2322
        %v2324 = vrot.slane %v2296, %v2323
        %v2325 = vcombine.low %v2303, %v2310
        %v2326 = vcombine.low %v2317, %v2324
        %v2328 = vunpack.c.l.s4 1966171168
        %v2329 = vunpack.c.0.s8 %v2328
        %v2330 = vlaneseq
        %v2331 = vshrl.u32 %v2330, 7
        %v2332 = vsub.s32 %v2329, %v2331
        %v2333 = vrot.slane %v2325, %v2332
        %v2335 = vunpack.c.l.s4 1966171168
        %v2336 = vunpack.c.0.s8 %v2335
        %v2337 = vlaneseq
        %v2338 = vshrl.u32 %v2337, 7
        %v2339 = vsub.s32 %v2336, %v2338
        %v2340 = vrot.slane %v2326, %v2339
        %v2341 = vcombine.low %v2333, %v2340
        %v2342 = vcombine.low %v1748, %v1752
        %v2343 = vcombine.low %v1756, %v1760
        %v2344 = vcombine.low %v1764, %v1768
        %v2345 = vcombine.low %v1772, %v1776
        %v2347 = vunpack.c.l.s4 1966171168
        %v2348 = vunpack.c.0.s8 %v2347
        %v2349 = vlaneseq
        %v2350 = vshrl.u32 %v2349, 7
        %v2351 = vsub.s32 %v2348, %v2350
        %v2352 = vrot.slane %v2342, %v2351
        %v2354 = vunpack.c.l.s4 1966171168
        %v2355 = vunpack.c.0.s8 %v2354
        %v2356 = vlaneseq
        %v2357 = vshrl.u32 %v2356, 7
        %v2358 = vsub.s32 %v2355, %v2357
        %v2359 = vrot.slane %v2343, %v2358
        %v2361 = vunpack.c.l.s4 1966171168
        %v2362 = vunpack.c.0.s8 %v2361
        %v2363 = vlaneseq
        %v2364 = vshrl.u32 %v2363, 7
        %v2365 = vsub.s32 %v2362, %v2364
        %v2366 = vrot.slane %v2344, %v2365
        %v2368 = vunpack.c.l.s4 1966171168
        %v2369 = vunpack.c.0.s8 %v2368
        %v2370 = vlaneseq
        %v2371 = vshrl.u32 %v2370, 7
        %v2372 = vsub.s32 %v2369, %v2371
        %v2373 = vrot.slane %v2345, %v2372
        %v2374 = vcombine.low %v2352, %v2359
        %v2375 = vcombine.low %v2366, %v2373
        %v2377 = vunpack.c.l.s4 1966171168
        %v2378 = vunpack.c.0.s8 %v2377
        %v2379 = vlaneseq
        %v2380 = vshrl.u32 %v2379, 7
        %v2381 = vsub.s32 %v2378, %v2380
        %v2382 = vrot.slane %v2374, %v2381
        %v2384 = vunpack.c.l.s4 1966171168
        %v2385 = vunpack.c.0.s8 %v2384
        %v2386 = vlaneseq
        %v2387 = vshrl.u32 %v2386, 7
        %v2388 = vsub.s32 %v2385, %v2387
        %v2389 = vrot.slane %v2375, %v2388
        %v2390 = vcombine.low %v2382, %v2389
        %v2391 = vcombine.low %v1780, %v1784
        %v2392 = vcombine.low %v1788, %v1792
        %v2393 = vcombine.low %v1796, %v1800
        %v2394 = vcombine.low %v1804, %v1808
        %v2396 = vunpack.c.l.s4 1966171168
        %v2397 = vunpack.c.0.s8 %v2396
        %v2398 = vlaneseq
        %v2399 = vshrl.u32 %v2398, 7
        %v2400 = vsub.s32 %v2397, %v2399
        %v2401 = vrot.slane %v2391, %v2400
        %v2403 = vunpack.c.l.s4 1966171168
        %v2404 = vunpack.c.0.s8 %v2403
        %v2405 = vlaneseq
        %v2406 = vshrl.u32 %v2405, 7
        %v2407 = vsub.s32 %v2404, %v2406
        %v2408 = vrot.slane %v2392, %v2407
        %v2410 = vunpack.c.l.s4 1966171168
        %v2411 = vunpack.c.0.s8 %v2410
        %v2412 = vlaneseq
        %v2413 = vshrl.u32 %v2412, 7
        %v2414 = vsub.s32 %v2411, %v2413
        %v2415 = vrot.slane %v2393, %v2414
        %v2417 = vunpack.c.l.s4 1966171168
        %v2418 = vunpack.c.0.s8 %v2417
        %v2419 = vlaneseq
        %v2420 = vshrl.u32 %v2419, 7
        %v2421 = vsub.s32 %v2418, %v2420
        %v2422 = vrot.slane %v2394, %v2421
        %v2423 = vcombine.low %v2401, %v2408
        %v2424 = vcombine.low %v2415, %v2422
        %v2426 = vunpack.c.l.s4 1966171168
        %v2427 = vunpack.c.0.s8 %v2426
        %v2428 = vlaneseq
        %v2429 = vshrl.u32 %v2428, 7
        %v2430 = vsub.s32 %v2427, %v2429
        %v2431 = vrot.slane %v2423, %v2430
        %v2433 = vunpack.c.l.s4 1966171168
        %v2434 = vunpack.c.0.s8 %v2433
        %v2435 = vlaneseq
        %v2436 = vshrl.u32 %v2435, 7
        %v2437 = vsub.s32 %v2434, %v2436
        %v2438 = vrot.slane %v2424, %v2437
        %v2439 = vcombine.low %v2431, %v2438
        %v2440 = vcombine.low %v1812, %v1816
        %v2441 = vcombine.low %v1820, %v1824
        %v2442 = vcombine.low %v1828, %v1832
        %v2443 = vcombine.low %v1836, %v1840
        %v2445 = vunpack.c.l.s4 1966171168
        %v2446 = vunpack.c.0.s8 %v2445
        %v2447 = vlaneseq
        %v2448 = vshrl.u32 %v2447, 7
        %v2449 = vsub.s32 %v2446, %v2448
        %v2450 = vrot.slane %v2440, %v2449
        %v2452 = vunpack.c.l.s4 1966171168
        %v2453 = vunpack.c.0.s8 %v2452
        %v2454 = vlaneseq
        %v2455 = vshrl.u32 %v2454, 7
        %v2456 = vsub.s32 %v2453, %v2455
        %v2457 = vrot.slane %v2441, %v2456
        %v2459 = vunpack.c.l.s4 1966171168
        %v2460 = vunpack.c.0.s8 %v2459
        %v2461 = vlaneseq
        %v2462 = vshrl.u32 %v2461, 7
        %v2463 = vsub.s32 %v2460, %v2462
        %v2464 = vrot.slane %v2442, %v2463
        %v2466 = vunpack.c.l.s4 1966171168
        %v2467 = vunpack.c.0.s8 %v2466
        %v2468 = vlaneseq
        %v2469 = vshrl.u32 %v2468, 7
        %v2470 = vsub.s32 %v2467, %v2469
        %v2471 = vrot.slane %v2443, %v2470
        %v2472 = vcombine.low %v2450, %v2457
        %v2473 = vcombine.low %v2464, %v2471
        %v2475 = vunpack.c.l.s4 1966171168
        %v2476 = vunpack.c.0.s8 %v2475
        %v2477 = vlaneseq
        %v2478 = vshrl.u32 %v2477, 7
        %v2479 = vsub.s32 %v2476, %v2478
        %v2480 = vrot.slane %v2472, %v2479
        %v2482 = vunpack.c.l.s4 1966171168
        %v2483 = vunpack.c.0.s8 %v2482
        %v2484 = vlaneseq
        %v2485 = vshrl.u32 %v2484, 7
        %v2486 = vsub.s32 %v2483, %v2485
        %v2487 = vrot.slane %v2473, %v2486
        %v2488 = vcombine.low %v2480, %v2487
        %v2489 = vcombine.low %v1844, %v1848
        %v2490 = vcombine.low %v1852, %v1856
        %v2491 = vcombine.low %v1860, %v1864
        %v2492 = vcombine.low %v1868, %v1872
        %v2494 = vunpack.c.l.s4 1966171168
        %v2495 = vunpack.c.0.s8 %v2494
        %v2496 = vlaneseq
        %v2497 = vshrl.u32 %v2496, 7
        %v2498 = vsub.s32 %v2495, %v2497
        %v2499 = vrot.slane %v2489, %v2498
        %v2501 = vunpack.c.l.s4 1966171168
        %v2502 = vunpack.c.0.s8 %v2501
        %v2503 = vlaneseq
        %v2504 = vshrl.u32 %v2503, 7
        %v2505 = vsub.s32 %v2502, %v2504
        %v2506 = vrot.slane %v2490, %v2505
        %v2508 = vunpack.c.l.s4 1966171168
        %v2509 = vunpack.c.0.s8 %v2508
        %v2510 = vlaneseq
        %v2511 = vshrl.u32 %v2510, 7
        %v2512 = vsub.s32 %v2509, %v2511
        %v2513 = vrot.slane %v2491, %v2512
        %v2515 = vunpack.c.l.s4 1966171168
        %v2516 = vunpack.c.0.s8 %v2515
        %v2517 = vlaneseq
        %v2518 = vshrl.u32 %v2517, 7
        %v2519 = vsub.s32 %v2516, %v2518
        %v2520 = vrot.slane %v2492, %v2519
        %v2521 = vcombine.low %v2499, %v2506
        %v2522 = vcombine.low %v2513, %v2520
        %v2524 = vunpack.c.l.s4 1966171168
        %v2525 = vunpack.c.0.s8 %v2524
        %v2526 = vlaneseq
        %v2527 = vshrl.u32 %v2526, 7
        %v2528 = vsub.s32 %v2525, %v2527
        %v2529 = vrot.slane %v2521, %v2528
        %v2531 = vunpack.c.l.s4 1966171168
        %v2532 = vunpack.c.0.s8 %v2531
        %v2533 = vlaneseq
        %v2534 = vshrl.u32 %v2533, 7
        %v2535 = vsub.s32 %v2532, %v2534
        %v2536 = vrot.slane %v2522, %v2535
        %v2537 = vcombine.low %v2529, %v2536
        %v2538 = vcombine.low %v1876, %v1880
        %v2539 = vcombine.low %v1884, %v1888
        %v2540 = vcombine.low %v1892, %v1896
        %v2541 = vcombine.low %v1900, %v1904
        %v2543 = vunpack.c.l.s4 1966171168
        %v2544 = vunpack.c.0.s8 %v2543
        %v2545 = vlaneseq
        %v2546 = vshrl.u32 %v2545, 7
        %v2547 = vsub.s32 %v2544, %v2546
        %v2548 = vrot.slane %v2538, %v2547
        %v2550 = vunpack.c.l.s4 1966171168
        %v2551 = vunpack.c.0.s8 %v2550
        %v2552 = vlaneseq
        %v2553 = vshrl.u32 %v2552, 7
        %v2554 = vsub.s32 %v2551, %v2553
        %v2555 = vrot.slane %v2539, %v2554
        %v2557 = vunpack.c.l.s4 1966171168
        %v2558 = vunpack.c.0.s8 %v2557
        %v2559 = vlaneseq
        %v2560 = vshrl.u32 %v2559, 7
        %v2561 = vsub.s32 %v2558, %v2560
        %v2562 = vrot.slane %v2540, %v2561
        %v2564 = vunpack.c.l.s4 1966171168
        %v2565 = vunpack.c.0.s8 %v2564
        %v2566 = vlaneseq
        %v2567 = vshrl.u32 %v2566, 7
        %v2568 = vsub.s32 %v2565, %v2567
        %v2569 = vrot.slane %v2541, %v2568
        %v2570 = vcombine.low %v2548, %v2555
        %v2571 = vcombine.low %v2562, %v2569
        %v2573 = vunpack.c.l.s4 1966171168
        %v2574 = vunpack.c.0.s8 %v2573
        %v2575 = vlaneseq
        %v2576 = vshrl.u32 %v2575, 7
        %v2577 = vsub.s32 %v2574, %v2576
        %v2578 = vrot.slane %v2570, %v2577
        %v2580 = vunpack.c.l.s4 1966171168
        %v2581 = vunpack.c.0.s8 %v2580
        %v2582 = vlaneseq
        %v2583 = vshrl.u32 %v2582, 7
        %v2584 = vsub.s32 %v2581, %v2583
        %v2585 = vrot.slane %v2571, %v2584
        %v2586 = vcombine.low %v2578, %v2585
        %v2587 = vcombine.low %v1908, %v1912
        %v2588 = vcombine.low %v1916, %v1920
        %v2589 = vcombine.low %v1924, %v1928
        %v2590 = vcombine.low %v1932, %v1936
        %v2592 = vunpack.c.l.s4 1966171168
        %v2593 = vunpack.c.0.s8 %v2592
        %v2594 = vlaneseq
        %v2595 = vshrl.u32 %v2594, 7
        %v2596 = vsub.s32 %v2593, %v2595
        %v2597 = vrot.slane %v2587, %v2596
        %v2599 = vunpack.c.l.s4 1966171168
        %v2600 = vunpack.c.0.s8 %v2599
        %v2601 = vlaneseq
        %v2602 = vshrl.u32 %v2601, 7
        %v2603 = vsub.s32 %v2600, %v2602
        %v2604 = vrot.slane %v2588, %v2603
        %v2606 = vunpack.c.l.s4 1966171168
        %v2607 = vunpack.c.0.s8 %v2606
        %v2608 = vlaneseq
        %v2609 = vshrl.u32 %v2608, 7
        %v2610 = vsub.s32 %v2607, %v2609
        %v2611 = vrot.slane %v2589, %v2610
        %v2613 = vunpack.c.l.s4 1966171168
        %v2614 = vunpack.c.0.s8 %v2613
        %v2615 = vlaneseq
        %v2616 = vshrl.u32 %v2615, 7
        %v2617 = vsub.s32 %v2614, %v2616
        %v2618 = vrot.slane %v2590, %v2617
        %v2619 = vcombine.low %v2597, %v2604
        %v2620 = vcombine.low %v2611, %v2618
        %v2622 = vunpack.c.l.s4 1966171168
        %v2623 = vunpack.c.0.s8 %v2622
        %v2624 = vlaneseq
        %v2625 = vshrl.u32 %v2624, 7
        %v2626 = vsub.s32 %v2623, %v2625
        %v2627 = vrot.slane %v2619, %v2626
        %v2629 = vunpack.c.l.s4 1966171168
        %v2630 = vunpack.c.0.s8 %v2629
        %v2631 = vlaneseq
        %v2632 = vshrl.u32 %v2631, 7
        %v2633 = vsub.s32 %v2630, %v2632
        %v2634 = vrot.slane %v2620, %v2633
        %v2635 = vcombine.low %v2627, %v2634
        %v2636 = vcombine.low %v1940, %v1944
        %v2637 = vcombine.low %v1948, %v1952
        %v2638 = vcombine.low %v1956, %v1960
        %v2639 = vcombine.low %v1964, %v1968
        %v2641 = vunpack.c.l.s4 1966171168
        %v2642 = vunpack.c.0.s8 %v2641
        %v2643 = vlaneseq
        %v2644 = vshrl.u32 %v2643, 7
        %v2645 = vsub.s32 %v2642, %v2644
        %v2646 = vrot.slane %v2636, %v2645
        %v2648 = vunpack.c.l.s4 1966171168
        %v2649 = vunpack.c.0.s8 %v2648
        %v2650 = vlaneseq
        %v2651 = vshrl.u32 %v2650, 7
        %v2652 = vsub.s32 %v2649, %v2651
        %v2653 = vrot.slane %v2637, %v2652
        %v2655 = vunpack.c.l.s4 1966171168
        %v2656 = vunpack.c.0.s8 %v2655
        %v2657 = vlaneseq
        %v2658 = vshrl.u32 %v2657, 7
        %v2659 = vsub.s32 %v2656, %v2658
        %v2660 = vrot.slane %v2638, %v2659
        %v2662 = vunpack.c.l.s4 1966171168
        %v2663 = vunpack.c.0.s8 %v2662
        %v2664 = vlaneseq
        %v2665 = vshrl.u32 %v2664, 7
        %v2666 = vsub.s32 %v2663, %v2665
        %v2667 = vrot.slane %v2639, %v2666
        %v2668 = vcombine.low %v2646, %v2653
        %v2669 = vcombine.low %v2660, %v2667
        %v2671 = vunpack.c.l.s4 1966171168
        %v2672 = vunpack.c.0.s8 %v2671
        %v2673 = vlaneseq
        %v2674 = vshrl.u32 %v2673, 7
        %v2675 = vsub.s32 %v2672, %v2674
        %v2676 = vrot.slane %v2668, %v2675
        %v2678 = vunpack.c.l.s4 1966171168
        %v2679 = vunpack.c.0.s8 %v2678
        %v2680 = vlaneseq
        %v2681 = vshrl.u32 %v2680, 7
        %v2682 = vsub.s32 %v2679, %v2681
        %v2683 = vrot.slane %v2669, %v2682
        %v2684 = vcombine.low %v2676, %v2683
        %v2685 = vcombine.low %v1972, %v1976
        %v2686 = vcombine.low %v1980, %v1984
        %v2687 = vcombine.low %v1988, %v1992
        %v2688 = vcombine.low %v1996, %v2000
        %v2690 = vunpack.c.l.s4 1966171168
        %v2691 = vunpack.c.0.s8 %v2690
        %v2692 = vlaneseq
        %v2693 = vshrl.u32 %v2692, 7
        %v2694 = vsub.s32 %v2691, %v2693
        %v2695 = vrot.slane %v2685, %v2694
        %v2697 = vunpack.c.l.s4 1966171168
        %v2698 = vunpack.c.0.s8 %v2697
        %v2699 = vlaneseq
        %v2700 = vshrl.u32 %v2699, 7
        %v2701 = vsub.s32 %v2698, %v2700
        %v2702 = vrot.slane %v2686, %v2701
        %v2704 = vunpack.c.l.s4 1966171168
        %v2705 = vunpack.c.0.s8 %v2704
        %v2706 = vlaneseq
        %v2707 = vshrl.u32 %v2706, 7
        %v2708 = vsub.s32 %v2705, %v2707
        %v2709 = vrot.slane %v2687, %v2708
        %v2711 = vunpack.c.l.s4 1966171168
        %v2712 = vunpack.c.0.s8 %v2711
        %v2713 = vlaneseq
        %v2714 = vshrl.u32 %v2713, 7
        %v2715 = vsub.s32 %v2712, %v2714
        %v2716 = vrot.slane %v2688, %v2715
        %v2717 = vcombine.low %v2695, %v2702
        %v2718 = vcombine.low %v2709, %v2716
        %v2720 = vunpack.c.l.s4 1966171168
        %v2721 = vunpack.c.0.s8 %v2720
        %v2722 = vlaneseq
        %v2723 = vshrl.u32 %v2722, 7
        %v2724 = vsub.s32 %v2721, %v2723
        %v2725 = vrot.slane %v2717, %v2724
        %v2727 = vunpack.c.l.s4 1966171168
        %v2728 = vunpack.c.0.s8 %v2727
        %v2729 = vlaneseq
        %v2730 = vshrl.u32 %v2729, 7
        %v2731 = vsub.s32 %v2728, %v2730
        %v2732 = vrot.slane %v2718, %v2731
        %v2733 = vcombine.low %v2725, %v2732
        %v2734 = vcombine.low %v2004, %v2008
        %v2735 = vcombine.low %v2012, %v2016
        %v2736 = vcombine.low %v2020, %v2024
        %v2737 = vcombine.low %v2028, %v2032
        %v2739 = vunpack.c.l.s4 1966171168
        %v2740 = vunpack.c.0.s8 %v2739
        %v2741 = vlaneseq
        %v2742 = vshrl.u32 %v2741, 7
        %v2743 = vsub.s32 %v2740, %v2742
        %v2744 = vrot.slane %v2734, %v2743
        %v2746 = vunpack.c.l.s4 1966171168
        %v2747 = vunpack.c.0.s8 %v2746
        %v2748 = vlaneseq
        %v2749 = vshrl.u32 %v2748, 7
        %v2750 = vsub.s32 %v2747, %v2749
        %v2751 = vrot.slane %v2735, %v2750
        %v2753 = vunpack.c.l.s4 1966171168
        %v2754 = vunpack.c.0.s8 %v2753
        %v2755 = vlaneseq
        %v2756 = vshrl.u32 %v2755, 7
        %v2757 = vsub.s32 %v2754, %v2756
        %v2758 = vrot.slane %v2736, %v2757
        %v2760 = vunpack.c.l.s4 1966171168
        %v2761 = vunpack.c.0.s8 %v2760
        %v2762 = vlaneseq
        %v2763 = vshrl.u32 %v2762, 7
        %v2764 = vsub.s32 %v2761, %v2763
        %v2765 = vrot.slane %v2737, %v2764
        %v2766 = vcombine.low %v2744, %v2751
        %v2767 = vcombine.low %v2758, %v2765
        %v2769 = vunpack.c.l.s4 1966171168
        %v2770 = vunpack.c.0.s8 %v2769
        %v2771 = vlaneseq
        %v2772 = vshrl.u32 %v2771, 7
        %v2773 = vsub.s32 %v2770, %v2772
        %v2774 = vrot.slane %v2766, %v2773
        %v2776 = vunpack.c.l.s4 1966171168
        %v2777 = vunpack.c.0.s8 %v2776
        %v2778 = vlaneseq
        %v2779 = vshrl.u32 %v2778, 7
        %v2780 = vsub.s32 %v2777, %v2779
        %v2781 = vrot.slane %v2767, %v2780
        %v2782 = vcombine.low %v2774, %v2781
        %v2783 = vcombine.low %v2036, %v2040
        %v2784 = vcombine.low %v2044, %v2048
        %v2785 = vcombine.low %v2052, %v2056
        %v2786 = vcombine.low %v2060, %v2064
        %v2788 = vunpack.c.l.s4 1966171168
        %v2789 = vunpack.c.0.s8 %v2788
        %v2790 = vlaneseq
        %v2791 = vshrl.u32 %v2790, 7
        %v2792 = vsub.s32 %v2789, %v2791
        %v2793 = vrot.slane %v2783, %v2792
        %v2795 = vunpack.c.l.s4 1966171168
        %v2796 = vunpack.c.0.s8 %v2795
        %v2797 = vlaneseq
        %v2798 = vshrl.u32 %v2797, 7
        %v2799 = vsub.s32 %v2796, %v2798
        %v2800 = vrot.slane %v2784, %v2799
        %v2802 = vunpack.c.l.s4 1966171168
        %v2803 = vunpack.c.0.s8 %v2802
        %v2804 = vlaneseq
        %v2805 = vshrl.u32 %v2804, 7
        %v2806 = vsub.s32 %v2803, %v2805
        %v2807 = vrot.slane %v2785, %v2806
        %v2809 = vunpack.c.l.s4 1966171168
        %v2810 = vunpack.c.0.s8 %v2809
        %v2811 = vlaneseq
        %v2812 = vshrl.u32 %v2811, 7
        %v2813 = vsub.s32 %v2810, %v2812
        %v2814 = vrot.slane %v2786, %v2813
        %v2815 = vcombine.low %v2793, %v2800
        %v2816 = vcombine.low %v2807, %v2814
        %v2818 = vunpack.c.l.s4 1966171168
        %v2819 = vunpack.c.0.s8 %v2818
        %v2820 = vlaneseq
        %v2821 = vshrl.u32 %v2820, 7
        %v2822 = vsub.s32 %v2819, %v2821
        %v2823 = vrot.slane %v2815, %v2822
        %v2825 = vunpack.c.l.s4 1966171168
        %v2826 = vunpack.c.0.s8 %v2825
        %v2827 = vlaneseq
        %v2828 = vshrl.u32 %v2827, 7
        %v2829 = vsub.s32 %v2826, %v2828
        %v2830 = vrot.slane %v2816, %v2829
        %v2831 = vcombine.low %v2823, %v2830
        %v2832 = vcombine.low %v2068, %v2072
        %v2833 = vcombine.low %v2076, %v2080
        %v2834 = vcombine.low %v2084, %v2088
        %v2835 = vcombine.low %v2092, %v2096
        %v2837 = vunpack.c.l.s4 1966171168
        %v2838 = vunpack.c.0.s8 %v2837
        %v2839 = vlaneseq
        %v2840 = vshrl.u32 %v2839, 7
        %v2841 = vsub.s32 %v2838, %v2840
        %v2842 = vrot.slane %v2832, %v2841
        %v2844 = vunpack.c.l.s4 1966171168
        %v2845 = vunpack.c.0.s8 %v2844
        %v2846 = vlaneseq
        %v2847 = vshrl.u32 %v2846, 7
        %v2848 = vsub.s32 %v2845, %v2847
        %v2849 = vrot.slane %v2833, %v2848
        %v2851 = vunpack.c.l.s4 1966171168
        %v2852 = vunpack.c.0.s8 %v2851
        %v2853 = vlaneseq
        %v2854 = vshrl.u32 %v2853, 7
        %v2855 = vsub.s32 %v2852, %v2854
        %v2856 = vrot.slane %v2834, %v2855
        %v2858 = vunpack.c.l.s4 1966171168
        %v2859 = vunpack.c.0.s8 %v2858
        %v2860 = vlaneseq
        %v2861 = vshrl.u32 %v2860, 7
        %v2862 = vsub.s32 %v2859, %v2861
        %v2863 = vrot.slane %v2835, %v2862
        %v2864 = vcombine.low %v2842, %v2849
        %v2865 = vcombine.low %v2856, %v2863
        %v2867 = vunpack.c.l.s4 1966171168
        %v2868 = vunpack.c.0.s8 %v2867
        %v2869 = vlaneseq
        %v2870 = vshrl.u32 %v2869, 7
        %v2871 = vsub.s32 %v2868, %v2870
        %v2872 = vrot.slane %v2864, %v2871
        %v2874 = vunpack.c.l.s4 1966171168
        %v2875 = vunpack.c.0.s8 %v2874
        %v2876 = vlaneseq
        %v2877 = vshrl.u32 %v2876, 7
        %v2878 = vsub.s32 %v2875, %v2877
        %v2879 = vrot.slane %v2865, %v2878
        %v2880 = vcombine.low %v2872, %v2879
        %2881 = vset.pattern.permute.xlu0 0
        %2882 = vperm.xlu0 %2881, %v2145
        %v2883 = vpop.permute.xlu0 %2882
        %2884 = vset.pattern.permute.xlu0 0
        %2885 = vperm.xlu0 %2884, %v2194
        %v2886 = vpop.permute.xlu0 %2885
        %2887 = vset.pattern.permute.xlu0 0
        %2888 = vperm.xlu0 %2887, %v2243
        %v2889 = vpop.permute.xlu0 %2888
        %2890 = vset.pattern.permute.xlu0 0
        %2891 = vperm.xlu0 %2890, %v2292
        %v2892 = vpop.permute.xlu0 %2891
        %2893 = vset.pattern.permute.xlu0 0
        %2894 = vperm.xlu0 %2893, %v2341
        %v2895 = vpop.permute.xlu0 %2894
        %2896 = vset.pattern.permute.xlu0 0
        %2897 = vperm.xlu0 %2896, %v2390
        %v2898 = vpop.permute.xlu0 %2897
        %2899 = vset.pattern.permute.xlu0 0
        %2900 = vperm.xlu0 %2899, %v2439
        %v2901 = vpop.permute.xlu0 %2900
        %2902 = vset.pattern.permute.xlu0 0
        %2903 = vperm.xlu0 %2902, %v2488
        %v2904 = vpop.permute.xlu0 %2903
        %2905 = vset.pattern.permute.xlu0 0
        %2906 = vperm.xlu0 %2905, %v2537
        %v2907 = vpop.permute.xlu0 %2906
        %2908 = vset.pattern.permute.xlu0 0
        %2909 = vperm.xlu0 %2908, %v2586
        %v2910 = vpop.permute.xlu0 %2909
        %2911 = vset.pattern.permute.xlu0 0
        %2912 = vperm.xlu0 %2911, %v2635
        %v2913 = vpop.permute.xlu0 %2912
        %2914 = vset.pattern.permute.xlu0 0
        %2915 = vperm.xlu0 %2914, %v2684
        %v2916 = vpop.permute.xlu0 %2915
        %2917 = vset.pattern.permute.xlu0 0
        %2918 = vperm.xlu0 %2917, %v2733
        %v2919 = vpop.permute.xlu0 %2918
        %2920 = vset.pattern.permute.xlu0 0
        %2921 = vperm.xlu0 %2920, %v2782
        %v2922 = vpop.permute.xlu0 %2921
        %2923 = vset.pattern.permute.xlu0 0
        %2924 = vperm.xlu0 %2923, %v2831
        %v2925 = vpop.permute.xlu0 %2924
        %2926 = vset.pattern.permute.xlu0 0
        %2927 = vperm.xlu0 %2926, %v2880
        %v2928 = vpop.permute.xlu0 %2927
        %v2929 = vlaneseq
        %v2930 = vand.u32 %v2929, 127
        %v2931 = vlaneseq
        %v2932 = vshrl.u32 %v2931, 7
        %v2933 = vsub.s32 %v2930, %v2932
        %v2934 = vrot.slane %v2883, %v2933
        %v2935 = vadd.s32 %v2930, 4294967288
        %v2936 = vlaneseq
        %v2937 = vshrl.u32 %v2936, 7
        %v2938 = vsub.s32 %v2935, %v2937
        %v2939 = vrot.slane %v2886, %v2938
        %vm2940 = vcmask 130112
        %v2941 = vsel %vm2940, %v2939, %v2934
        %v2942 = vadd.s32 %v2930, 4294967280
        %v2943 = vlaneseq
        %v2944 = vshrl.u32 %v2943, 7
        %v2945 = vsub.s32 %v2942, %v2944
        %v2946 = vrot.slane %v2889, %v2945
        %vm2947 = vcmask 195712
        %v2948 = vsel %vm2947, %v2946, %v2941
        %v2949 = vadd.s32 %v2930, 4294967272
        %v2950 = vlaneseq
        %v2951 = vshrl.u32 %v2950, 7
        %v2952 = vsub.s32 %v2949, %v2951
        %v2953 = vrot.slane %v2892, %v2952
        %vm2954 = vcmask 261312
        %v2955 = vsel %vm2954, %v2953, %v2948
        %v2956 = vadd.s32 %v2930, 4294967264
        %v2957 = vlaneseq
        %v2958 = vshrl.u32 %v2957, 7
        %v2959 = vsub.s32 %v2956, %v2958
        %v2960 = vrot.slane %v2895, %v2959
        %vm2961 = vcmask 326912
        %v2962 = vsel %vm2961, %v2960, %v2955
        %v2963 = vadd.s32 %v2930, 4294967256
        %v2964 = vlaneseq
        %v2965 = vshrl.u32 %v2964, 7
        %v2966 = vsub.s32 %v2963, %v2965
        %v2967 = vrot.slane %v2898, %v2966
        %vm2968 = vcmask 392512
        %v2969 = vsel %vm2968, %v2967, %v2962
        %v2970 = vadd.s32 %v2930, 4294967248
        %v2971 = vlaneseq
        %v2972 = vshrl.u32 %v2971, 7
        %v2973 = vsub.s32 %v2970, %v2972
        %v2974 = vrot.slane %v2901, %v2973
        %vm2975 = vcmask 458112
        %v2976 = vsel %vm2975, %v2974, %v2969
        %v2977 = vadd.s32 %v2930, 4294967240
        %v2978 = vlaneseq
        %v2979 = vshrl.u32 %v2978, 7
        %v2980 = vsub.s32 %v2977, %v2979
        %v2981 = vrot.slane %v2904, %v2980
        %vm2982 = vcmask 523712
        %v2983 = vsel %vm2982, %v2981, %v2976
        %v2984 = vadd.s32 %v2930, 4294967232
        %v2985 = vlaneseq
        %v2986 = vshrl.u32 %v2985, 7
        %v2987 = vsub.s32 %v2984, %v2986
        %v2988 = vrot.slane %v2907, %v2987
        %vm2989 = vcmask 589312
        %v2990 = vsel %vm2989, %v2988, %v2983
        %v2991 = vadd.s32 %v2930, 4294967224
        %v2992 = vlaneseq
        %v2993 = vshrl.u32 %v2992, 7
        %v2994 = vsub.s32 %v2991, %v2993
        %v2995 = vrot.slane %v2910, %v2994
        %vm2996 = vcmask 654912
        %v2997 = vsel %vm2996, %v2995, %v2990
        %v2998 = vadd.s32 %v2930, 4294967216
        %v2999 = vlaneseq
        %v3000 = vshrl.u32 %v2999, 7
        %v3001 = vsub.s32 %v2998, %v3000
        %v3002 = vrot.slane %v2913, %v3001
        %vm3003 = vcmask 720512
        %v3004 = vsel %vm3003, %v3002, %v2997
        %v3005 = vadd.s32 %v2930, 4294967208
        %v3006 = vlaneseq
        %v3007 = vshrl.u32 %v3006, 7
        %v3008 = vsub.s32 %v3005, %v3007
        %v3009 = vrot.slane %v2916, %v3008
        %vm3010 = vcmask 786112
        %v3011 = vsel %vm3010, %v3009, %v3004
        %v3012 = vadd.s32 %v2930, 4294967200
        %v3013 = vlaneseq
        %v3014 = vshrl.u32 %v3013, 7
        %v3015 = vsub.s32 %v3012, %v3014
        %v3016 = vrot.slane %v2919, %v3015
        %vm3017 = vcmask 851712
        %v3018 = vsel %vm3017, %v3016, %v3011
        %v3019 = vadd.s32 %v2930, 4294967192
        %v3020 = vlaneseq
        %v3021 = vshrl.u32 %v3020, 7
        %v3022 = vsub.s32 %v3019, %v3021
        %v3023 = vrot.slane %v2922, %v3022
        %vm3024 = vcmask 917312
        %v3025 = vsel %vm3024, %v3023, %v3018
        %v3026 = vadd.s32 %v2930, 4294967184
        %v3027 = vlaneseq
        %v3028 = vshrl.u32 %v3027, 7
        %v3029 = vsub.s32 %v3026, %v3028
        %v3030 = vrot.slane %v2925, %v3029
        %vm3031 = vcmask 982912
        %v3032 = vsel %vm3031, %v3030, %v3025
        %v3033 = vadd.s32 %v2930, 4294967176
        %v3034 = vlaneseq
        %v3035 = vshrl.u32 %v3034, 7
        %v3036 = vsub.s32 %v3033, %v3035
        %v3037 = vrot.slane %v2928, %v3036
        %vm3038 = vcmask 1048512
        %v3039 = vsel %vm3038, %v3037, %v3032
        %v3041 = vunpack.c.l.s4 1966171168
        %v3042 = vunpack.c.0.s8 %v3041
        %v3043 = vlaneseq
        %v3044 = vshrl.u32 %v3043, 7
        %v3045 = vsub.s32 %v3042, %v3044
        %v3046 = vrot.slane %v3039, %v3045
        %v3048 = vunpack.c.l.s4 1966171168
        %v3049 = vunpack.c.0.s8 %v3048
        %v3050 = vlaneseq
        %v3051 = vshrl.u32 %v3050, 7
        %v3052 = vsub.s32 %v3049, %v3051
        %v3053 = vrot.slane %v3046, %v3052
        %v3055 = vadd.f32 %v1536, %v3053
        %3056 = vst [vmem:[%s1535] sm:$0x1] %v3055
      $region36: #{local_density_prob.1} parent=27 // pred_fallthru
        _
      // Predicated region
      $region37: #{local_density_prob.1} parent=27 // pred_check
        %p3057 = pneg %p214
      $region38: #{local_density_prob.1} parent=27 // pred_check_branch
        %3059 = sbr.rel (%p3057) target = $region40
      $region39: #{local_density_prob.1} parent=27 // pred_region
        %v3060 = vld [vmem:[#allocation2] sm:$0x1]
        %3061 = vst [vmem:[%s213] sm:$0x1] %v3060
      $region40: #{local_density_prob.1} parent=27 // pred_fallthru
        _
      %p3062 = scmp.lt.s32.totalorder %s21, 1
      %s3063 = scalar_select %p3062, %s21, 1
      %s3064 = scalar_lea.vmem %s4, %s3063
      // Predicated region
      $region41: #{local_density_prob.1} parent=27 // pred_check
        %p3065 = pneg %p107
      $region42: #{local_density_prob.1} parent=27 // pred_check_branch
        %3067 = sbr.rel (%p3065) target = $region44
      $region43: #{local_density_prob.1} parent=27 // pred_region
        _
      $region44: #{local_density_prob.1} parent=27 // pred_fallthru
        _
    $region28: #{local_density_prob.1} parent=5 // pred_fallthru
      _
    %p3068 = scmp.le.s32.totalorder 2, %s12
    // Predicated region
    $region45: #{local_density_prob.1} parent=5 // pred_check
      %p3069 = pneg %p3068
    $region46: #{local_density_prob.1} parent=5 // pred_check_branch
      %3071 = sbr.rel (%p3069) target = $region48
    $region47: #{local_density_prob.1} parent=5 // pred_region
      %s3072 = ssub.s32 %s12, 2
      // Predicated region
      $region49: #{local_density_prob.1} parent=47 // pred_check
        %p3073 = pneg %p113
      $region50: #{local_density_prob.1} parent=47 // pred_check_branch
        %3075 = sbr.rel (%p3073) target = $region52
      $region51: #{local_density_prob.1} parent=47 // pred_region
        %p3076 = scmp.lt.s32.totalorder %s23, 1
        %s3077 = scalar_select %p3076, %s23, 1
        %s3078 = scalar_lea.vmem %s4, %s3077
      $region52: #{local_density_prob.1} parent=47 // pred_fallthru
        _
    $region48: #{local_density_prob.1} parent=5 // pred_fallthru
      _
  $region6: #{local_density_prob.1} parent=0 // loop_footer
    %s16 = sadd.s32 1, %s12
  $region7: #{local_density_prob.1} parent=0 // loop_footer_branch
    %11 = sbr.rel target = $region3
  $region8: #{local_density_prob.1} parent=0 // loop_exit
    _

</llo_original>
